<compile_context>
chip_gen: v7x
topology: tpu7x:2x2x1
jax: 0.10.0
libtpu: 0.0.40
codegen_flags: <defaults>
</compile_context>

<pallas_src>
import functools

import jax
import jax.numpy as jnp
from jax.experimental import pallas as pl
from jax.experimental.pallas import tpu as pltpu


_VMEM_SPEC = pl.BlockSpec(memory_space=pltpu.MemorySpace.VMEM)


def _round_up(x, m):
    return ((x + m - 1) // m) * m


# --------------------------------------------------------------------------
# Fused conv-block kernel: (conv-as-matmul, transposed) + bias (+ReLU) (+BN)
# --------------------------------------------------------------------------
def _conv_block_kernel(*refs, fuse_relu, fuse_bn, relu_first, eps, m_valid):
    """Lane-dense fused conv block.

    refs = (w, patches_t, bias[, gamma, beta], out)
      w:         (Cout, Kp)   bf16   (Kp = K padded to multiple of 16)
      patches_t: (Kp,  Mp)    bf16   (Mp = M padded to multiple of 128; M on lanes)
      bias/gamma/beta: (Cout, 1) f32
      out:       (Cout, Mp)   f32
    """
    if fuse_bn:
        w_ref, p_ref, b_ref, g_ref, beta_ref, o_ref = refs
    else:
        w_ref, p_ref, b_ref, o_ref = refs

    # MXU matmul, f32 accumulator; M (large) lives on the lane axis.
    acc = jnp.dot(w_ref[...], p_ref[...], preferred_element_type=jnp.float32)
    acc = acc + b_ref[...]                      # (Cout, 1) broadcast over lanes

    def do_relu(a):
        return jnp.maximum(a, 0.0)

    def do_bn(a):
        # F.batch_norm(training=True): per-channel batch mean / biased variance,
        # computed single-pass on the VMEM-resident tile.  Padded lanes (>= M)
        # are masked out of the statistics.
        mp = a.shape[1]
        if m_valid == mp:
            mean = jnp.sum(a, axis=1, keepdims=True) / m_valid
            d = a - mean
            var = jnp.sum(d * d, axis=1, keepdims=True) / m_valid
        else:
            mask = jax.lax.broadcasted_iota(jnp.int32, a.shape, 1) < m_valid
            a0 = jnp.where(mask, a, 0.0)
            mean = jnp.sum(a0, axis=1, keepdims=True) / m_valid
            d = jnp.where(mask, a - mean, 0.0)
            var = jnp.sum(d * d, axis=1, keepdims=True) / m_valid
        scale = g_ref[...] * jax.lax.rsqrt(var + eps)       # (Cout, 1)
        shift = beta_ref[...] - mean * scale                # (Cout, 1)
        return a * scale + shift                            # 2 VALU ops / elem

    if fuse_relu and fuse_bn:
        acc = do_bn(do_relu(acc)) if relu_first else do_relu(do_bn(acc))
    elif fuse_relu:
        acc = do_relu(acc)
    elif fuse_bn:
        acc = do_bn(acc)

    o_ref[...] = acc.astype(o_ref.dtype)


# --------------------------------------------------------------------------
# Wrappers (im2col / pooling / flatten glue is plain JAX, all under one jit)
# --------------------------------------------------------------------------
def _im2col_t(x_cnhw, KH, KW, stride, Ho, Wo):
    """Transposed im2col: (KH*KW*Cin, N*Ho*Wo); k-order = (kh, kw, cin)."""
    Cin, N = x_cnhw.shape[0], x_cnhw.shape[1]
    cols = []
    for kh in range(KH):
        for kw in range(KW):
            sl = x_cnhw[:, :,
                        kh:kh + stride * (Ho - 1) + 1:stride,
                        kw:kw + stride * (Wo - 1) + 1:stride]
            cols.append(sl.reshape(Cin, N * Ho * Wo))
    return jnp.concatenate(cols, axis=0)


def conv_block(x_cnhw, weight, bias, stride, padding,
               post_ops=(), gamma=None, beta=None, eps=1e-5):
    """F.conv2d (+ fused relu / batch_norm epilogue). weight: (Cout,Cin,KH,KW).

    Input / output layout: channel-major (C, N, H, W).
    """
    Cin, N, H, W = x_cnhw.shape
    Cout, Cin2, KH, KW = weight.shape
    assert Cin == Cin2
    if padding > 0:
        x_cnhw = jnp.pad(
            x_cnhw, ((0, 0), (0, 0), (padding, padding), (padding, padding)))
        H += 2 * padding
        W += 2 * padding
    Ho = (H - KH) // stride + 1
    Wo = (W - KW) // stride + 1
    M = N * Ho * Wo
    K = KH * KW * Cin

    patches_t = _im2col_t(x_cnhw, KH, KW, stride, Ho, Wo)           # (K, M)
    w_mat = jnp.transpose(weight, (0, 2, 3, 1)).reshape(Cout, K)    # (Cout, K)

    # K -> multiple of 16 (bf16 sublane packing), M -> multiple of 128 (lanes).
    Kp = _round_up(K, 16)
    Mp = _round_up(M, 128)
    patches_t = jnp.pad(patches_t, ((0, Kp - K), (0, Mp - M))).astype(jnp.bfloat16)
    w_mat = jnp.pad(w_mat, ((0, 0), (0, Kp - K))).astype(jnp.bfloat16)

    fuse_relu = 'relu' in post_ops
    fuse_bn = 'bn' in post_ops
    relu_first = True
    if fuse_relu and fuse_bn:
        relu_first = post_ops.index('relu') < post_ops.index('bn')

    args = [w_mat, patches_t, bias.reshape(Cout, 1).astype(jnp.float32)]
    if fuse_bn:
        args.append(gamma.reshape(Cout, 1).astype(jnp.float32))
        args.append(beta.reshape(Cout, 1).astype(jnp.float32))

    kern = functools.partial(_conv_block_kernel, fuse_relu=fuse_relu,
                             fuse_bn=fuse_bn, relu_first=relu_first,
                             eps=eps, m_valid=M)
    out = pl.pallas_call(
        kern,
        out_shape=jax.ShapeDtypeStruct((Cout, Mp), jnp.float32),
        in_specs=[_VMEM_SPEC] * len(args),
        out_specs=_VMEM_SPEC,
    )(*args)
    return out[:, :M].reshape(Cout, N, Ho, Wo)


def max_pool2d_cnhw(x, kernel, stride, padding):
    """PyTorch F.max_pool2d (floor mode). x: (C, N, H, W). Pure XLA under jit:
    the activation is tiny here, so a strided-slice max is cheaper than an
    extra pallas_call + window-stack relayout."""
    C, N, H, W = x.shape
    if padding > 0:
        x = jnp.pad(x, ((0, 0), (0, 0), (padding, padding), (padding, padding)),
                    constant_values=-jnp.inf)
        H += 2 * padding
        W += 2 * padding
    Ho = (H - kernel) // stride + 1
    Wo = (W - kernel) // stride + 1
    out = None
    for i in range(kernel):
        for j in range(kernel):
            win = x[:, :,
                    i:i + stride * (Ho - 1) + 1:stride,
                    j:j + stride * (Wo - 1) + 1:stride]
            out = win if out is None else jnp.maximum(out, win)
    return out


def _batch_norm_standalone(x, gamma, beta, eps=1e-5):
    """Fallback for a 'bn' entry that is not fused behind a conv (unused by the
    miniImageNet config)."""
    if x.ndim == 4:                      # (C, N, H, W): stats over (N, H, W)
        mean = jnp.mean(x, axis=(1, 2, 3), keepdims=True)
        var = jnp.mean((x - mean) ** 2, axis=(1, 2, 3), keepdims=True)
        g = gamma.reshape(-1, 1, 1, 1)
        b = beta.reshape(-1, 1, 1, 1)
    else:                                # (N, C): stats over N
        mean = jnp.mean(x, axis=0, keepdims=True)
        var = jnp.mean((x - mean) ** 2, axis=0, keepdims=True)
        g = gamma.reshape(1, -1)
        b = beta.reshape(1, -1)
    return (x - mean) * jax.lax.rsqrt(var + eps) * g + b


# --------------------------------------------------------------------------
# Learner (config-driven, same structure / parameter layout as PyTorch module)
# --------------------------------------------------------------------------
class Learner:
    def __init__(self, config, key):
        self.config = config
        self.vars = []
        self.vars_bn = []
        for name, param in config:
            if name == 'conv2d':
                cout, cin, kh, kw = param[:4]
                key, sub = jax.random.split(key)
                fan_in = cin * kh * kw
                w = jax.random.normal(sub, (cout, cin, kh, kw), jnp.float32) \
                    * jnp.sqrt(2.0 / fan_in)          # kaiming_normal_ (fan_in, relu)
                self.vars.append(w)
                self.vars.append(jnp.zeros((cout,), jnp.float32))
            elif name == 'linear':
                out_f, in_f = param
                key, sub = jax.random.split(key)
                w = jax.random.normal(sub, (out_f, in_f), jnp.float32) \
                    * jnp.sqrt(2.0 / in_f)
                self.vars.append(w)
                self.vars.append(jnp.zeros((out_f,), jnp.float32))
            elif name == 'bn':
                c = param[0]
                self.vars.append(jnp.ones((c,), jnp.float32))
                self.vars.append(jnp.zeros((c,), jnp.float32))
                self.vars_bn.extend(
                    [jnp.zeros((c,), jnp.float32), jnp.zeros((c,), jnp.float32)])
            elif name in ['tanh', 'relu', 'upsample', 'avg_pool2d', 'max_pool2d',
                          'flatten', 'reshape', 'leakyrelu', 'sigmoid']:
                continue
            else:
                raise NotImplementedError
        # jit the whole forward: all pallas_calls + glue compile into one XLA
        # program; MAML fast-weights reuse the same cache entry (same shapes).
        self._jit_forward = jax.jit(self._forward_impl)

    # -- traced implementation (called under jax.jit) -----------------------
    def _forward_impl(self, x, vars):
        assert x.ndim == 4
        x = jnp.transpose(x, (1, 0, 2, 3))   # NCHW -> (C, N, H, W) channel-major
        cfg = self.config
        idx = 0
        bn_idx = 0
        i = 0
        while i < len(cfg):
            name, param = cfg[i]
            if name == 'conv2d':
                w, b = vars[idx], vars[idx + 1]
                idx += 2
                # Peek ahead: fuse an immediately-following relu / bn (each at
                # most once) into the conv kernel epilogue, preserving order.
                post = []
                gamma = beta = None
                j = i + 1
                while j < len(cfg):
                    nm = cfg[j][0]
                    if nm == 'relu' and 'relu' not in post:
                        post.append('relu')
                    elif nm == 'bn' and 'bn' not in post:
                        gamma, beta = vars[idx], vars[idx + 1]
                        idx += 2
                        bn_idx += 2
                        post.append('bn')
                    else:
                        break
                    j += 1
                assert len(post) == len(set(post)) and len(post) <= 2
                x = conv_block(x, w, b, stride=param[4], padding=param[5],
                               post_ops=tuple(post), gamma=gamma, beta=beta)
                i = j
                continue
            elif name == 'linear':
                w, b = vars[idx], vars[idx + 1]
                idx += 2
                # Tiny GEMM (e.g. 2x8 @ 8x5): pallas_call overhead would dwarf
                # the compute, so let XLA do it in the same jit.
                x = jnp.dot(x.astype(jnp.float32),
                            jnp.transpose(w).astype(jnp.float32)) + b
            elif name == 'bn':
                g, bta = vars[idx], vars[idx + 1]
                idx += 2
                bn_idx += 2
                x = _batch_norm_standalone(x, g, bta)
            elif name == 'relu':
                x = jnp.maximum(x, 0.0)
            elif name == 'max_pool2d':
                x = max_pool2d_cnhw(x, param[0], param[1], param[2])
            elif name == 'flatten':
                # Match PyTorch x.view(N, -1) on NCHW ordering.
                C, N, H, W = x.shape
                x = jnp.transpose(x, (1, 0, 2, 3)).reshape(N, C * H * W)
            else:
                # tanh/sigmoid/leakyrelu/upsample/avg_pool2d/reshape unused in
                # the miniImageNet config.
                raise NotImplementedError(name)
            i += 1
        assert idx == len(vars)
        assert bn_idx == len(self.vars_bn)
        return x

    # -- public API (PyTorch-like) ------------------------------------------
    def forward(self, x, vars=None, bn_training=True):
        """x: NCHW (PyTorch convention). bn_training=True semantics only."""
        if vars is None:
            vars = self.vars
        return self._jit_forward(x, tuple(vars))

    def parameters(self):
        return self.vars


if __name__ == "__main__":
    # Standard MAML 4-conv-block architecture, scaled down (ch=8, 48x48 input).
    n_way = 5
    ch = 8
    config = [
        ('conv2d', [ch, 3, 3, 3, 1, 0]),
        ('relu', [True]),
        ('bn', [ch]),
        ('max_pool2d', [2, 2, 0]),
        ('conv2d', [ch, ch, 3, 3, 1, 0]),
        ('relu', [True]),
        ('bn', [ch]),
        ('max_pool2d', [2, 2, 0]),
        ('conv2d', [ch, ch, 3, 3, 1, 0]),
        ('relu', [True]),
        ('bn', [ch]),
        ('max_pool2d', [2, 2, 0]),
        ('conv2d', [ch, ch, 3, 3, 1, 0]),
        ('relu', [True]),
        ('bn', [ch]),
        ('max_pool2d', [2, 1, 0]),
        ('flatten', []),
        ('linear', [n_way, ch * 1 * 1]),
    ]

    key = jax.random.PRNGKey(0)
    k_param, k_x = jax.random.split(key)
    learner = Learner(config, k_param)

    x = jax.random.normal(k_x, (2, 3, 48, 48), jnp.float32)   # NCHW like PyTorch
    out = learner.forward(x, bn_training=True)
    out = jax.block_until_ready(out)
    assert out.shape == (2, n_way), out.shape
    assert bool(jnp.all(jnp.isfinite(out)))
    # second call exercises the jit cache (MAML inner loop reuses it)
    out2 = jax.block_until_ready(learner.forward(x, vars=learner.vars))
    assert out2.shape == (2, n_way)
    print("KERNEL_OK")
</pallas_src>

<mosaic_0001>
module attributes {stable_mosaic.version = 11 : i64} {
  func.func @_conv_block_kernel(%arg0: memref<8x32xbf16, #tpu.memory_space<vmem>>, %arg1: memref<32x4352xbf16, #tpu.memory_space<vmem>>, %arg2: memref<8x1xf32, #tpu.memory_space<vmem>>, %arg3: memref<8x1xf32, #tpu.memory_space<vmem>>, %arg4: memref<8x1xf32, #tpu.memory_space<vmem>>, %arg5: memref<8x4352xf32, #tpu.memory_space<vmem>>) attributes {dimension_semantics = [], scalar_prefetch = 0 : i64, scratch_operands = 0 : i64, tpu.core_type = #tpu.core_type<tc>} {
    %c0 = arith.constant 0 : index
    %c0_0 = arith.constant 0 : index
    %0 = vector.load %arg0[%c0, %c0_0] : memref<8x32xbf16, #tpu.memory_space<vmem>>, vector<8x32xbf16>
    %c0_1 = arith.constant 0 : index
    %c0_2 = arith.constant 0 : index
    %1 = vector.load %arg1[%c0_1, %c0_2] : memref<32x4352xbf16, #tpu.memory_space<vmem>>, vector<32x4352xbf16>
    %cst = arith.constant dense<0.000000e+00> : vector<8x4352xf32>
    %2 = tpu.matmul %0, %1, %cst {dimension_numbers = #tpu.dot_dimension_numbers<[1], [0], [0], [1], [0, 0, 1, 1], [], []>} : vector<8x32xbf16>, vector<32x4352xbf16>, vector<8x4352xf32> -> vector<8x4352xf32>
    %c0_3 = arith.constant 0 : index
    %c0_4 = arith.constant 0 : index
    %3 = vector.load %arg2[%c0_3, %c0_4] : memref<8x1xf32, #tpu.memory_space<vmem>>, vector<8x1xf32>
    %4 = vector.broadcast %3 : vector<8x1xf32> to vector<8x4352xf32>
    %5 = arith.addf %2, %4 : vector<8x4352xf32>
    %cst_5 = arith.constant 0.000000e+00 : f32
    %6 = vector.broadcast %cst_5 : f32 to vector<8x4352xf32>
    %7 = arith.maximumf %5, %6 : vector<8x4352xf32>
    %8 = tpu.iota {dimensions = array<i32: 1>} : vector<8x4352xi32>
    %c4232_i32 = arith.constant 4232 : i32
    %9 = vector.broadcast %c4232_i32 : i32 to vector<8x4352xi32>
    %10 = arith.cmpi slt, %8, %9 : vector<8x4352xi32>
    %cst_6 = arith.constant 0.000000e+00 : f32
    %11 = vector.broadcast %cst_6 : f32 to vector<8x4352xf32>
    %12 = arith.select %10, %7, %11 : vector<8x4352xi1>, vector<8x4352xf32>
    %cst_7 = arith.constant dense<0.000000e+00> : vector<8xf32>
    %13 = vector.multi_reduction <add>, %12, %cst_7 [1] : vector<8x4352xf32> to vector<8xf32>
    %14 = vector.shape_cast %13 : vector<8xf32> to vector<8x1xf32>
    %cst_8 = arith.constant 4.232000e+03 : f32
    %15 = vector.broadcast %cst_8 : f32 to vector<8x1xf32>
    %16 = arith.divf %14, %15 : vector<8x1xf32>
    %17 = vector.broadcast %16 : vector<8x1xf32> to vector<8x4352xf32>
    %18 = arith.subf %7, %17 : vector<8x4352xf32>
    %cst_9 = arith.constant 0.000000e+00 : f32
    %19 = vector.broadcast %cst_9 : f32 to vector<8x4352xf32>
    %20 = arith.select %10, %18, %19 : vector<8x4352xi1>, vector<8x4352xf32>
    %21 = arith.mulf %20, %20 : vector<8x4352xf32>
    %cst_10 = arith.constant dense<0.000000e+00> : vector<8xf32>
    %22 = vector.multi_reduction <add>, %21, %cst_10 [1] : vector<8x4352xf32> to vector<8xf32>
    %23 = vector.shape_cast %22 : vector<8xf32> to vector<8x1xf32>
    %cst_11 = arith.constant 4.232000e+03 : f32
    %24 = vector.broadcast %cst_11 : f32 to vector<8x1xf32>
    %25 = arith.divf %23, %24 : vector<8x1xf32>
    %c0_12 = arith.constant 0 : index
    %c0_13 = arith.constant 0 : index
    %26 = vector.load %arg3[%c0_12, %c0_13] : memref<8x1xf32, #tpu.memory_space<vmem>>, vector<8x1xf32>
    %cst_14 = arith.constant 9.99999974E-6 : f32
    %27 = vector.broadcast %cst_14 : f32 to vector<8x1xf32>
    %28 = arith.addf %25, %27 : vector<8x1xf32>
    %29 = math.rsqrt %28 : vector<8x1xf32>
    %30 = arith.mulf %26, %29 : vector<8x1xf32>
    %c0_15 = arith.constant 0 : index
    %c0_16 = arith.constant 0 : index
    %31 = vector.load %arg4[%c0_15, %c0_16] : memref<8x1xf32, #tpu.memory_space<vmem>>, vector<8x1xf32>
    %32 = arith.mulf %16, %30 : vector<8x1xf32>
    %33 = arith.subf %31, %32 : vector<8x1xf32>
    %34 = vector.broadcast %30 : vector<8x1xf32> to vector<8x4352xf32>
    %35 = arith.mulf %7, %34 : vector<8x4352xf32>
    %36 = vector.broadcast %33 : vector<8x1xf32> to vector<8x4352xf32>
    %37 = arith.addf %35, %36 : vector<8x4352xf32>
    %c0_17 = arith.constant 0 : index
    %c0_18 = arith.constant 0 : index
    %38 = vector.load %arg5[%c0_17, %c0_18] : memref<8x4352xf32, #tpu.memory_space<vmem>>, vector<8x4352xf32>
    tpu.vector_store %arg5[%c0_17, %c0_18], %37 {strides = array<i32>} : memref<8x4352xf32, #tpu.memory_space<vmem>>, vector<8x4352xf32>,
    return
  }
}

module attributes {stable_mosaic.version = 11 : i64} {
  func.func @_conv_block_kernel(%arg0: memref<8x80xbf16, #tpu.memory_space<vmem>>, %arg1: memref<80x896xbf16, #tpu.memory_space<vmem>>, %arg2: memref<8x1xf32, #tpu.memory_space<vmem>>, %arg3: memref<8x1xf32, #tpu.memory_space<vmem>>, %arg4: memref<8x1xf32, #tpu.memory_space<vmem>>, %arg5: memref<8x896xf32, #tpu.memory_space<vmem>>) attributes {dimension_semantics = [], scalar_prefetch = 0 : i64, scratch_operands = 0 : i64, tpu.core_type = #tpu.core_type<tc>} {
    %c0 = arith.constant 0 : index
    %c0_0 = arith.constant 0 : index
    %0 = vector.load %arg0[%c0, %c0_0] : memref<8x80xbf16, #tpu.memory_space<vmem>>, vector<8x80xbf16>
    %c0_1 = arith.constant 0 : index
    %c0_2 = arith.constant 0 : index
    %1 = vector.load %arg1[%c0_1, %c0_2] : memref<80x896xbf16, #tpu.memory_space<vmem>>, vector<80x896xbf16>
    %cst = arith.constant dense<0.000000e+00> : vector<8x896xf32>
    %2 = tpu.matmul %0, %1, %cst {dimension_numbers = #tpu.dot_dimension_numbers<[1], [0], [0], [1], [0, 0, 1, 1], [], []>} : vector<8x80xbf16>, vector<80x896xbf16>, vector<8x896xf32> -> vector<8x896xf32>
    %c0_3 = arith.constant 0 : index
    %c0_4 = arith.constant 0 : index
    %3 = vector.load %arg2[%c0_3, %c0_4] : memref<8x1xf32, #tpu.memory_space<vmem>>, vector<8x1xf32>
    %4 = vector.broadcast %3 : vector<8x1xf32> to vector<8x896xf32>
    %5 = arith.addf %2, %4 : vector<8x896xf32>
    %cst_5 = arith.constant 0.000000e+00 : f32
    %6 = vector.broadcast %cst_5 : f32 to vector<8x896xf32>
    %7 = arith.maximumf %5, %6 : vector<8x896xf32>
    %8 = tpu.iota {dimensions = array<i32: 1>} : vector<8x896xi32>
    %c882_i32 = arith.constant 882 : i32
    %9 = vector.broadcast %c882_i32 : i32 to vector<8x896xi32>
    %10 = arith.cmpi slt, %8, %9 : vector<8x896xi32>
    %cst_6 = arith.constant 0.000000e+00 : f32
    %11 = vector.broadcast %cst_6 : f32 to vector<8x896xf32>
    %12 = arith.select %10, %7, %11 : vector<8x896xi1>, vector<8x896xf32>
    %cst_7 = arith.constant dense<0.000000e+00> : vector<8xf32>
    %13 = vector.multi_reduction <add>, %12, %cst_7 [1] : vector<8x896xf32> to vector<8xf32>
    %14 = vector.shape_cast %13 : vector<8xf32> to vector<8x1xf32>
    %cst_8 = arith.constant 8.820000e+02 : f32
    %15 = vector.broadcast %cst_8 : f32 to vector<8x1xf32>
    %16 = arith.divf %14, %15 : vector<8x1xf32>
    %17 = vector.broadcast %16 : vector<8x1xf32> to vector<8x896xf32>
    %18 = arith.subf %7, %17 : vector<8x896xf32>
    %cst_9 = arith.constant 0.000000e+00 : f32
    %19 = vector.broadcast %cst_9 : f32 to vector<8x896xf32>
    %20 = arith.select %10, %18, %19 : vector<8x896xi1>, vector<8x896xf32>
    %21 = arith.mulf %20, %20 : vector<8x896xf32>
    %cst_10 = arith.constant dense<0.000000e+00> : vector<8xf32>
    %22 = vector.multi_reduction <add>, %21, %cst_10 [1] : vector<8x896xf32> to vector<8xf32>
    %23 = vector.shape_cast %22 : vector<8xf32> to vector<8x1xf32>
    %cst_11 = arith.constant 8.820000e+02 : f32
    %24 = vector.broadcast %cst_11 : f32 to vector<8x1xf32>
    %25 = arith.divf %23, %24 : vector<8x1xf32>
    %c0_12 = arith.constant 0 : index
    %c0_13 = arith.constant 0 : index
    %26 = vector.load %arg3[%c0_12, %c0_13] : memref<8x1xf32, #tpu.memory_space<vmem>>, vector<8x1xf32>
    %cst_14 = arith.constant 9.99999974E-6 : f32
    %27 = vector.broadcast %cst_14 : f32 to vector<8x1xf32>
    %28 = arith.addf %25, %27 : vector<8x1xf32>
    %29 = math.rsqrt %28 : vector<8x1xf32>
    %30 = arith.mulf %26, %29 : vector<8x1xf32>
    %c0_15 = arith.constant 0 : index
    %c0_16 = arith.constant 0 : index
    %31 = vector.load %arg4[%c0_15, %c0_16] : memref<8x1xf32, #tpu.memory_space<vmem>>, vector<8x1xf32>
    %32 = arith.mulf %16, %30 : vector<8x1xf32>
    %33 = arith.subf %31, %32 : vector<8x1xf32>
    %34 = vector.broadcast %30 : vector<8x1xf32> to vector<8x896xf32>
    %35 = arith.mulf %7, %34 : vector<8x896xf32>
    %36 = vector.broadcast %33 : vector<8x1xf32> to vector<8x896xf32>
    %37 = arith.addf %35, %36 : vector<8x896xf32>
    %c0_17 = arith.constant 0 : index
    %c0_18 = arith.constant 0 : index
    %38 = vector.load %arg5[%c0_17, %c0_18] : memref<8x896xf32, #tpu.memory_space<vmem>>, vector<8x896xf32>
    tpu.vector_store %arg5[%c0_17, %c0_18], %37 {strides = array<i32>} : memref<8x896xf32, #tpu.memory_space<vmem>>, vector<8x896xf32>,
    return
  }
}

module attributes {stable_mosaic.version = 11 : i64} {
  func.func @_conv_block_kernel(%arg0: memref<8x80xbf16, #tpu.memory_space<vmem>>, %arg1: memref<80x128xbf16, #tpu.memory_space<vmem>>, %arg2: memref<8x1xf32, #tpu.memory_space<vmem>>, %arg3: memref<8x1xf32, #tpu.memory_space<vmem>>, %arg4: memref<8x1xf32, #tpu.memory_space<vmem>>, %arg5: memref<8x128xf32, #tpu.memory_space<vmem>>) attributes {dimension_semantics = [], scalar_prefetch = 0 : i64, scratch_operands = 0 : i64, tpu.core_type = #tpu.core_type<tc>} {
    %c0 = arith.constant 0 : index
    %c0_0 = arith.constant 0 : index
    %0 = vector.load %arg0[%c0, %c0_0] : memref<8x80xbf16, #tpu.memory_space<vmem>>, vector<8x80xbf16>
    %c0_1 = arith.constant 0 : index
    %c0_2 = arith.constant 0 : index
    %1 = vector.load %arg1[%c0_1, %c0_2] : memref<80x128xbf16, #tpu.memory_space<vmem>>, vector<80x128xbf16>
    %cst = arith.constant dense<0.000000e+00> : vector<8x128xf32>
    %2 = tpu.matmul %0, %1, %cst {dimension_numbers = #tpu.dot_dimension_numbers<[1], [0], [0], [1], [0, 0, 1, 1], [], []>} : vector<8x80xbf16>, vector<80x128xbf16>, vector<8x128xf32> -> vector<8x128xf32>
    %c0_3 = arith.constant 0 : index
    %c0_4 = arith.constant 0 : index
    %3 = vector.load %arg2[%c0_3, %c0_4] : memref<8x1xf32, #tpu.memory_space<vmem>>, vector<8x1xf32>
    %4 = vector.broadcast %3 : vector<8x1xf32> to vector<8x128xf32>
    %5 = arith.addf %2, %4 : vector<8x128xf32>
    %cst_5 = arith.constant 0.000000e+00 : f32
    %6 = vector.broadcast %cst_5 : f32 to vector<8x128xf32>
    %7 = arith.maximumf %5, %6 : vector<8x128xf32>
    %cst_6 = arith.constant dense<0.000000e+00> : vector<8xf32>
    %8 = vector.multi_reduction <add>, %7, %cst_6 [1] : vector<8x128xf32> to vector<8xf32>
    %9 = vector.shape_cast %8 : vector<8xf32> to vector<8x1xf32>
    %cst_7 = arith.constant 1.280000e+02 : f32
    %10 = vector.broadcast %cst_7 : f32 to vector<8x1xf32>
    %11 = arith.divf %9, %10 : vector<8x1xf32>
    %12 = vector.broadcast %11 : vector<8x1xf32> to vector<8x128xf32>
    %13 = arith.subf %7, %12 : vector<8x128xf32>
    %14 = arith.mulf %13, %13 : vector<8x128xf32>
    %cst_8 = arith.constant dense<0.000000e+00> : vector<8xf32>
    %15 = vector.multi_reduction <add>, %14, %cst_8 [1] : vector<8x128xf32> to vector<8xf32>
    %16 = vector.shape_cast %15 : vector<8xf32> to vector<8x1xf32>
    %cst_9 = arith.constant 1.280000e+02 : f32
    %17 = vector.broadcast %cst_9 : f32 to vector<8x1xf32>
    %18 = arith.divf %16, %17 : vector<8x1xf32>
    %c0_10 = arith.constant 0 : index
    %c0_11 = arith.constant 0 : index
    %19 = vector.load %arg3[%c0_10, %c0_11] : memref<8x1xf32, #tpu.memory_space<vmem>>, vector<8x1xf32>
    %cst_12 = arith.constant 9.99999974E-6 : f32
    %20 = vector.broadcast %cst_12 : f32 to vector<8x1xf32>
    %21 = arith.addf %18, %20 : vector<8x1xf32>
    %22 = math.rsqrt %21 : vector<8x1xf32>
    %23 = arith.mulf %19, %22 : vector<8x1xf32>
    %c0_13 = arith.constant 0 : index
    %c0_14 = arith.constant 0 : index
    %24 = vector.load %arg4[%c0_13, %c0_14] : memref<8x1xf32, #tpu.memory_space<vmem>>, vector<8x1xf32>
    %25 = arith.mulf %11, %23 : vector<8x1xf32>
    %26 = arith.subf %24, %25 : vector<8x1xf32>
    %27 = vector.broadcast %23 : vector<8x1xf32> to vector<8x128xf32>
    %28 = arith.mulf %7, %27 : vector<8x128xf32>
    %29 = vector.broadcast %26 : vector<8x1xf32> to vector<8x128xf32>
    %30 = arith.addf %28, %29 : vector<8x128xf32>
    %c0_15 = arith.constant 0 : index
    %c0_16 = arith.constant 0 : index
    %31 = vector.load %arg5[%c0_15, %c0_16] : memref<8x128xf32, #tpu.memory_space<vmem>>, vector<8x128xf32>
    tpu.vector_store %arg5[%c0_15, %c0_16], %30 {strides = array<i32>} : memref<8x128xf32, #tpu.memory_space<vmem>>, vector<8x128xf32>,
    return
  }
}

module attributes {stable_mosaic.version = 11 : i64} {
  func.func @_conv_block_kernel(%arg0: memref<8x80xbf16, #tpu.memory_space<vmem>>, %arg1: memref<80x128xbf16, #tpu.memory_space<vmem>>, %arg2: memref<8x1xf32, #tpu.memory_space<vmem>>, %arg3: memref<8x1xf32, #tpu.memory_space<vmem>>, %arg4: memref<8x1xf32, #tpu.memory_space<vmem>>, %arg5: memref<8x128xf32, #tpu.memory_space<vmem>>) attributes {dimension_semantics = [], scalar_prefetch = 0 : i64, scratch_operands = 0 : i64, tpu.core_type = #tpu.core_type<tc>} {
    %c0 = arith.constant 0 : index
    %c0_0 = arith.constant 0 : index
    %0 = vector.load %arg0[%c0, %c0_0] : memref<8x80xbf16, #tpu.memory_space<vmem>>, vector<8x80xbf16>
    %c0_1 = arith.constant 0 : index
    %c0_2 = arith.constant 0 : index
    %1 = vector.load %arg1[%c0_1, %c0_2] : memref<80x128xbf16, #tpu.memory_space<vmem>>, vector<80x128xbf16>
    %cst = arith.constant dense<0.000000e+00> : vector<8x128xf32>
    %2 = tpu.matmul %0, %1, %cst {dimension_numbers = #tpu.dot_dimension_numbers<[1], [0], [0], [1], [0, 0, 1, 1], [], []>} : vector<8x80xbf16>, vector<80x128xbf16>, vector<8x128xf32> -> vector<8x128xf32>
    %c0_3 = arith.constant 0 : index
    %c0_4 = arith.constant 0 : index
    %3 = vector.load %arg2[%c0_3, %c0_4] : memref<8x1xf32, #tpu.memory_space<vmem>>, vector<8x1xf32>
    %4 = vector.broadcast %3 : vector<8x1xf32> to vector<8x128xf32>
    %5 = arith.addf %2, %4 : vector<8x128xf32>
    %cst_5 = arith.constant 0.000000e+00 : f32
    %6 = vector.broadcast %cst_5 : f32 to vector<8x128xf32>
    %7 = arith.maximumf %5, %6 : vector<8x128xf32>
    %8 = tpu.iota {dimensions = array<i32: 1>} : vector<8x128xi32>
    %c8_i32 = arith.constant 8 : i32
    %9 = vector.broadcast %c8_i32 : i32 to vector<8x128xi32>
    %10 = arith.cmpi slt, %8, %9 : vector<8x128xi32>
    %cst_6 = arith.constant 0.000000e+00 : f32
    %11 = vector.broadcast %cst_6 : f32 to vector<8x128xf32>
    %12 = arith.select %10, %7, %11 : vector<8x128xi1>, vector<8x128xf32>
    %cst_7 = arith.constant dense<0.000000e+00> : vector<8xf32>
    %13 = vector.multi_reduction <add>, %12, %cst_7 [1] : vector<8x128xf32> to vector<8xf32>
    %14 = vector.shape_cast %13 : vector<8xf32> to vector<8x1xf32>
    %cst_8 = arith.constant 8.000000e+00 : f32
    %15 = vector.broadcast %cst_8 : f32 to vector<8x1xf32>
    %16 = arith.divf %14, %15 : vector<8x1xf32>
    %17 = vector.broadcast %16 : vector<8x1xf32> to vector<8x128xf32>
    %18 = arith.subf %7, %17 : vector<8x128xf32>
    %cst_9 = arith.constant 0.000000e+00 : f32
    %19 = vector.broadcast %cst_9 : f32 to vector<8x128xf32>
    %20 = arith.select %10, %18, %19 : vector<8x128xi1>, vector<8x128xf32>
    %21 = arith.mulf %20, %20 : vector<8x128xf32>
    %cst_10 = arith.constant dense<0.000000e+00> : vector<8xf32>
    %22 = vector.multi_reduction <add>, %21, %cst_10 [1] : vector<8x128xf32> to vector<8xf32>
    %23 = vector.shape_cast %22 : vector<8xf32> to vector<8x1xf32>
    %cst_11 = arith.constant 8.000000e+00 : f32
    %24 = vector.broadcast %cst_11 : f32 to vector<8x1xf32>
    %25 = arith.divf %23, %24 : vector<8x1xf32>
    %c0_12 = arith.constant 0 : index
    %c0_13 = arith.constant 0 : index
    %26 = vector.load %arg3[%c0_12, %c0_13] : memref<8x1xf32, #tpu.memory_space<vmem>>, vector<8x1xf32>
    %cst_14 = arith.constant 9.99999974E-6 : f32
    %27 = vector.broadcast %cst_14 : f32 to vector<8x1xf32>
    %28 = arith.addf %25, %27 : vector<8x1xf32>
    %29 = math.rsqrt %28 : vector<8x1xf32>
    %30 = arith.mulf %26, %29 : vector<8x1xf32>
    %c0_15 = arith.constant 0 : index
    %c0_16 = arith.constant 0 : index
    %31 = vector.load %arg4[%c0_15, %c0_16] : memref<8x1xf32, #tpu.memory_space<vmem>>, vector<8x1xf32>
    %32 = arith.mulf %16, %30 : vector<8x1xf32>
    %33 = arith.subf %31, %32 : vector<8x1xf32>
    %34 = vector.broadcast %30 : vector<8x1xf32> to vector<8x128xf32>
    %35 = arith.mulf %7, %34 : vector<8x128xf32>
    %36 = vector.broadcast %33 : vector<8x1xf32> to vector<8x128xf32>
    %37 = arith.addf %35, %36 : vector<8x128xf32>
    %c0_17 = arith.constant 0 : index
    %c0_18 = arith.constant 0 : index
    %38 = vector.load %arg5[%c0_17, %c0_18] : memref<8x128xf32, #tpu.memory_space<vmem>>, vector<8x128xf32>
    tpu.vector_store %arg5[%c0_17, %c0_18], %37 {strides = array<i32>} : memref<8x128xf32, #tpu.memory_space<vmem>>, vector<8x128xf32>,
    return
  }
}

</mosaic_0001>

<llo_original>
// kernel: _forward_impl.4
$region0: #{_forward_impl.4}
  #allocation0 [shape = 'u32[]', space=smem, size = 0x4, offset = 0x4, fixed_abs, tag = 'smem constant byte address 0x4 - core index']
  #allocation1 [shape = 'u32[144,128]{1,0:T(1,128)}', space=vmem, size = 0x12000, scoped, tag = 'internal scratch']
  %s0 = inlined_call_operand.vmem [shape: bf16[8,32], index: 0, kind: input, shape index: {}]
  %s1 = inlined_call_operand.vmem [shape: bf16[32,4352], index: 1, kind: input, shape index: {}]
  %s2 = inlined_call_operand.vmem [shape: f32[8,1], index: 2, kind: input, shape index: {}]
  %s3 = inlined_call_operand.vmem [shape: f32[8,1], index: 3, kind: input, shape index: {}]
  %s4 = inlined_call_operand.vmem [shape: f32[8,1], index: 4, kind: input, shape index: {}]
  %s5 = inlined_call_operand.vmem [shape: f32[8,4352], index: 5, kind: output, shape index: {}]
  %s6 = sld [smem:[#allocation0]]
  $region30: #{_forward_impl.4} parent=0
    _
  %s8 = ssub.s32 1, %s6
  %s9 = scalar_select 0, %s8, %s6
  // Predicated region
  $region2: #{_forward_impl.4} parent=0 // pred_check
    _
  $region3: #{_forward_impl.4} parent=0 // pred_check_branch
    %11 = sbr.rel (0) target = $region5
  $region4: #{_forward_impl.4} parent=0 // pred_region
    _
  $region5: #{_forward_impl.4} parent=0 // pred_fallthru
    _
  // Predicated region
  $region6: #{_forward_impl.4} parent=0 // pred_check
    _
  $region7: #{_forward_impl.4} parent=0 // pred_check_branch
    %13 = sbr.rel (0) target = $region9
  $region8: #{_forward_impl.4} parent=0 // pred_region
    _
  $region9: #{_forward_impl.4} parent=0 // pred_fallthru
    _
  // Predicated region
  $region10: #{_forward_impl.4} parent=0 // pred_check
    _
  $region11: #{_forward_impl.4} parent=0 // pred_check_branch
    %15 = sbr.rel (0) target = $region13
  $region12: #{_forward_impl.4} parent=0 // pred_region
    _
  $region13: #{_forward_impl.4} parent=0 // pred_fallthru
    _
  // Predicated region
  $region14: #{_forward_impl.4} parent=0 // pred_check
    _
  $region15: #{_forward_impl.4} parent=0 // pred_check_branch
    %17 = sbr.rel (0) target = $region17
  $region16: #{_forward_impl.4} parent=0 // pred_region
    _
  $region17: #{_forward_impl.4} parent=0 // pred_fallthru
    _
  // Predicated region
  $region18: #{_forward_impl.4} parent=0 // pred_check
    _
  $region19: #{_forward_impl.4} parent=0 // pred_check_branch
    %19 = sbr.rel (0) target = $region21
  $region20: #{_forward_impl.4} parent=0 // pred_region
    _
  $region21: #{_forward_impl.4} parent=0 // pred_fallthru
    _
  %v21 = vld [vmem:[%s0] sm:$0xf]
  %v22 = vld [vmem:[%s1] sm:$0xff]
  %v23 = vld [vmem:[%s1 + $0x8] sm:$0xff]
  %v24 = vld [vmem:[%s1 + $0x10] sm:$0xff]
  %v25 = vld [vmem:[%s1 + $0x18] sm:$0xff]
  %v26 = vld [vmem:[%s1 + $0x20] sm:$0xff]
  %v27 = vld [vmem:[%s1 + $0x28] sm:$0xff]
  %v28 = vld [vmem:[%s1 + $0x30] sm:$0xff]
  %v29 = vld [vmem:[%s1 + $0x38] sm:$0xff]
  %v30 = vld [vmem:[%s1 + $0x40] sm:$0xff]
  %v31 = vld [vmem:[%s1 + $0x48] sm:$0xff]
  %v32 = vld [vmem:[%s1 + $0x50] sm:$0xff]
  %v33 = vld [vmem:[%s1 + $0x58] sm:$0xff]
  %v34 = vld [vmem:[%s1 + $0x60] sm:$0xff]
  %v35 = vld [vmem:[%s1 + $0x68] sm:$0xff]
  %v36 = vld [vmem:[%s1 + $0x70] sm:$0xff]
  %v37 = vld [vmem:[%s1 + $0x78] sm:$0xff]
  %v38 = vld [vmem:[%s1 + $0x80] sm:$0xff]
  %v39 = vld [vmem:[%s1 + $0x88] sm:$0xff]
  %v40 = vld [vmem:[%s1 + $0x90] sm:$0xff]
  %v41 = vld [vmem:[%s1 + $0x98] sm:$0xff]
  %v42 = vld [vmem:[%s1 + $0xa0] sm:$0xff]
  %v43 = vld [vmem:[%s1 + $0xa8] sm:$0xff]
  %v44 = vld [vmem:[%s1 + $0xb0] sm:$0xff]
  %v45 = vld [vmem:[%s1 + $0xb8] sm:$0xff]
  %v46 = vld [vmem:[%s1 + $0xc0] sm:$0xff]
  %v47 = vld [vmem:[%s1 + $0xc8] sm:$0xff]
  %v48 = vld [vmem:[%s1 + $0xd0] sm:$0xff]
  %v49 = vld [vmem:[%s1 + $0xd8] sm:$0xff]
  %v50 = vld [vmem:[%s1 + $0xe0] sm:$0xff]
  %v51 = vld [vmem:[%s1 + $0xe8] sm:$0xff]
  %v52 = vld [vmem:[%s1 + $0xf0] sm:$0xff]
  %v53 = vld [vmem:[%s1 + $0xf8] sm:$0xff]
  %v54 = vld [vmem:[%s1 + $0x100] sm:$0xff]
  %v55 = vld [vmem:[%s1 + $0x108] sm:$0xff]
  %v56 = vld [vmem:[%s1 + $0x110] sm:$0xff]
  %v57 = vld [vmem:[%s1 + $0x118] sm:$0xff]
  %v58 = vld [vmem:[%s1 + $0x120] sm:$0xff]
  %v59 = vld [vmem:[%s1 + $0x128] sm:$0xff]
  %v60 = vld [vmem:[%s1 + $0x130] sm:$0xff]
  %v61 = vld [vmem:[%s1 + $0x138] sm:$0xff]
  %v62 = vld [vmem:[%s1 + $0x140] sm:$0xff]
  %v63 = vld [vmem:[%s1 + $0x148] sm:$0xff]
  %v64 = vld [vmem:[%s1 + $0x150] sm:$0xff]
  %v65 = vld [vmem:[%s1 + $0x158] sm:$0xff]
  %v66 = vld [vmem:[%s1 + $0x160] sm:$0xff]
  %v67 = vld [vmem:[%s1 + $0x168] sm:$0xff]
  %v68 = vld [vmem:[%s1 + $0x170] sm:$0xff]
  %v69 = vld [vmem:[%s1 + $0x178] sm:$0xff]
  %v70 = vld [vmem:[%s1 + $0x180] sm:$0xff]
  %v71 = vld [vmem:[%s1 + $0x188] sm:$0xff]
  %v72 = vld [vmem:[%s1 + $0x190] sm:$0xff]
  %v73 = vld [vmem:[%s1 + $0x198] sm:$0xff]
  %v74 = vld [vmem:[%s1 + $0x1a0] sm:$0xff]
  %v75 = vld [vmem:[%s1 + $0x1a8] sm:$0xff]
  %v76 = vld [vmem:[%s1 + $0x1b0] sm:$0xff]
  %v77 = vld [vmem:[%s1 + $0x1b8] sm:$0xff]
  %v78 = vld [vmem:[%s1 + $0x1c0] sm:$0xff]
  %v79 = vld [vmem:[%s1 + $0x1c8] sm:$0xff]
  %v80 = vld [vmem:[%s1 + $0x1d0] sm:$0xff]
  %v81 = vld [vmem:[%s1 + $0x1d8] sm:$0xff]
  %v82 = vld [vmem:[%s1 + $0x1e0] sm:$0xff]
  %v83 = vld [vmem:[%s1 + $0x1e8] sm:$0xff]
  %v84 = vld [vmem:[%s1 + $0x1f0] sm:$0xff]
  %v85 = vld [vmem:[%s1 + $0x1f8] sm:$0xff]
  %v86 = vld [vmem:[%s1 + $0x200] sm:$0xff]
  %v87 = vld [vmem:[%s1 + $0x208] sm:$0xff]
  %v88 = vld [vmem:[%s1 + $0x210] sm:$0xff]
  %v89 = vld [vmem:[%s1 + $0x218] sm:$0xff]
  %v90 = vld [vmem:[%s2] sm:$0xff]
  %92 = vset.pattern.permute.xlu0 0
  %93 = vperm.xlu0 %92, %v90
  %v94 = vpop.permute.xlu0 %93
  %v164 = vunpack.c.l.b16 %v22
  %v165 = vunpack.c.h.b16 %v22
  %v166 = vunpack.c.l.b16 %v23
  %v167 = vunpack.c.h.b16 %v23
  %v168 = vunpack.c.l.b16 %v24
  %v169 = vunpack.c.h.b16 %v24
  %v170 = vunpack.c.l.b16 %v25
  %v171 = vunpack.c.h.b16 %v25
  %v172 = vunpack.c.l.b16 %v26
  %v173 = vunpack.c.h.b16 %v26
  %v174 = vunpack.c.l.b16 %v27
  %v175 = vunpack.c.h.b16 %v27
  %v176 = vunpack.c.l.b16 %v28
  %v177 = vunpack.c.h.b16 %v28
  %v178 = vunpack.c.l.b16 %v29
  %v179 = vunpack.c.h.b16 %v29
  %v180 = vunpack.c.l.b16 %v30
  %v181 = vunpack.c.h.b16 %v30
  %v182 = vunpack.c.l.b16 %v31
  %v183 = vunpack.c.h.b16 %v31
  %v184 = vunpack.c.l.b16 %v32
  %v185 = vunpack.c.h.b16 %v32
  %v186 = vunpack.c.l.b16 %v33
  %v187 = vunpack.c.h.b16 %v33
  %v188 = vunpack.c.l.b16 %v34
  %v189 = vunpack.c.h.b16 %v34
  %v190 = vunpack.c.l.b16 %v35
  %v191 = vunpack.c.h.b16 %v35
  %v192 = vunpack.c.l.b16 %v36
  %v193 = vunpack.c.h.b16 %v36
  %v194 = vunpack.c.l.b16 %v37
  %v195 = vunpack.c.h.b16 %v37
  %v196 = vunpack.c.l.b16 %v38
  %v197 = vunpack.c.h.b16 %v38
  %v198 = vunpack.c.l.b16 %v39
  %v199 = vunpack.c.h.b16 %v39
  %v200 = vunpack.c.l.b16 %v40
  %v201 = vunpack.c.h.b16 %v40
  %v202 = vunpack.c.l.b16 %v41
  %v203 = vunpack.c.h.b16 %v41
  %v204 = vunpack.c.l.b16 %v42
  %v205 = vunpack.c.h.b16 %v42
  %v206 = vunpack.c.l.b16 %v43
  %v207 = vunpack.c.h.b16 %v43
  %v208 = vunpack.c.l.b16 %v44
  %v209 = vunpack.c.h.b16 %v44
  %v210 = vunpack.c.l.b16 %v45
  %v211 = vunpack.c.h.b16 %v45
  %v212 = vunpack.c.l.b16 %v46
  %v213 = vunpack.c.h.b16 %v46
  %v214 = vunpack.c.l.b16 %v47
  %v215 = vunpack.c.h.b16 %v47
  %v216 = vunpack.c.l.b16 %v48
  %v217 = vunpack.c.h.b16 %v48
  %v218 = vunpack.c.l.b16 %v49
  %v219 = vunpack.c.h.b16 %v49
  %v220 = vunpack.c.l.b16 %v50
  %v221 = vunpack.c.h.b16 %v50
  %v222 = vunpack.c.l.b16 %v51
  %v223 = vunpack.c.h.b16 %v51
  %v224 = vunpack.c.l.b16 %v52
  %v225 = vunpack.c.h.b16 %v52
  %v226 = vunpack.c.l.b16 %v53
  %v227 = vunpack.c.h.b16 %v53
  %v228 = vunpack.c.l.b16 %v54
  %v229 = vunpack.c.h.b16 %v54
  %v230 = vunpack.c.l.b16 %v55
  %v231 = vunpack.c.h.b16 %v55
  %v232 = vunpack.c.l.b16 %v56
  %v233 = vunpack.c.h.b16 %v56
  %v234 = vunpack.c.l.b16 %v57
  %v235 = vunpack.c.h.b16 %v57
  %v236 = vunpack.c.l.b16 %v58
  %v237 = vunpack.c.h.b16 %v58
  %v238 = vunpack.c.l.b16 %v59
  %v239 = vunpack.c.h.b16 %v59
  %v240 = vunpack.c.l.b16 %v60
  %v241 = vunpack.c.h.b16 %v60
  %v242 = vunpack.c.l.b16 %v61
  %v243 = vunpack.c.h.b16 %v61
  %v244 = vunpack.c.l.b16 %v62
  %v245 = vunpack.c.h.b16 %v62
  %v246 = vunpack.c.l.b16 %v63
  %v247 = vunpack.c.h.b16 %v63
  %v248 = vunpack.c.l.b16 %v64
  %v249 = vunpack.c.h.b16 %v64
  %v250 = vunpack.c.l.b16 %v65
  %v251 = vunpack.c.h.b16 %v65
  %v252 = vunpack.c.l.b16 %v66
  %v253 = vunpack.c.h.b16 %v66
  %v254 = vunpack.c.l.b16 %v67
  %v255 = vunpack.c.h.b16 %v67
  %v256 = vunpack.c.l.b16 %v68
  %v257 = vunpack.c.h.b16 %v68
  %v258 = vunpack.c.l.b16 %v69
  %v259 = vunpack.c.h.b16 %v69
  %v260 = vunpack.c.l.b16 %v70
  %v261 = vunpack.c.h.b16 %v70
  %v262 = vunpack.c.l.b16 %v71
  %v263 = vunpack.c.h.b16 %v71
  %v264 = vunpack.c.l.b16 %v72
  %v265 = vunpack.c.h.b16 %v72
  %v266 = vunpack.c.l.b16 %v73
  %v267 = vunpack.c.h.b16 %v73
  %v268 = vunpack.c.l.b16 %v74
  %v269 = vunpack.c.h.b16 %v74
  %v270 = vunpack.c.l.b16 %v75
  %v271 = vunpack.c.h.b16 %v75
  %v272 = vunpack.c.l.b16 %v76
  %v273 = vunpack.c.h.b16 %v76
  %v274 = vunpack.c.l.b16 %v77
  %v275 = vunpack.c.h.b16 %v77
  %v276 = vunpack.c.l.b16 %v78
  %v277 = vunpack.c.h.b16 %v78
  %v278 = vunpack.c.l.b16 %v79
  %v279 = vunpack.c.h.b16 %v79
  %v280 = vunpack.c.l.b16 %v80
  %v281 = vunpack.c.h.b16 %v80
  %v282 = vunpack.c.l.b16 %v81
  %v283 = vunpack.c.h.b16 %v81
  %v284 = vunpack.c.l.b16 %v82
  %v285 = vunpack.c.h.b16 %v82
  %v286 = vunpack.c.l.b16 %v83
  %v287 = vunpack.c.h.b16 %v83
  %v288 = vunpack.c.l.b16 %v84
  %v289 = vunpack.c.h.b16 %v84
  %v290 = vunpack.c.l.b16 %v85
  %v291 = vunpack.c.h.b16 %v85
  %v292 = vunpack.c.l.b16 %v86
  %v293 = vunpack.c.h.b16 %v86
  %v294 = vunpack.c.l.b16 %v87
  %v295 = vunpack.c.h.b16 %v87
  %v296 = vunpack.c.l.b16 %v88
  %v297 = vunpack.c.h.b16 %v88
  %v298 = vunpack.c.l.b16 %v89
  %v299 = vunpack.c.h.b16 %v89
  %v300 = vpack.c.b16 %v198, %v164
  %v301 = vpack.c.b16 %v199, %v165
  %v302 = vpack.c.b16 %v200, %v166
  %v303 = vpack.c.b16 %v201, %v167
  %v304 = vpack.c.b16 %v202, %v168
  %v305 = vpack.c.b16 %v203, %v169
  %v306 = vpack.c.b16 %v204, %v170
  %v307 = vpack.c.b16 %v205, %v171
  %v308 = vpack.c.b16 %v206, %v172
  %v309 = vpack.c.b16 %v207, %v173
  %v310 = vpack.c.b16 %v208, %v174
  %v311 = vpack.c.b16 %v209, %v175
  %v312 = vpack.c.b16 %v210, %v176
  %v313 = vpack.c.b16 %v211, %v177
  %v314 = vpack.c.b16 %v212, %v178
  %v315 = vpack.c.b16 %v213, %v179
  %v316 = vpack.c.b16 %v214, %v180
  %v317 = vpack.c.b16 %v215, %v181
  %v318 = vpack.c.b16 %v216, %v182
  %v319 = vpack.c.b16 %v217, %v183
  %v320 = vpack.c.b16 %v218, %v184
  %v321 = vpack.c.b16 %v219, %v185
  %v322 = vpack.c.b16 %v220, %v186
  %v323 = vpack.c.b16 %v221, %v187
  %v324 = vpack.c.b16 %v222, %v188
  %v325 = vpack.c.b16 %v223, %v189
  %v326 = vpack.c.b16 %v224, %v190
  %v327 = vpack.c.b16 %v225, %v191
  %v328 = vpack.c.b16 %v226, %v192
  %v329 = vpack.c.b16 %v227, %v193
  %v330 = vpack.c.b16 %v228, %v194
  %v331 = vpack.c.b16 %v229, %v195
  %v332 = vpack.c.b16 %v230, %v196
  %v333 = vpack.c.b16 %v231, %v197
  %v334 = vpack.c.b16 %v266, %v232
  %v335 = vpack.c.b16 %v267, %v233
  %v336 = vpack.c.b16 %v268, %v234
  %v337 = vpack.c.b16 %v269, %v235
  %v338 = vpack.c.b16 %v270, %v236
  %v339 = vpack.c.b16 %v271, %v237
  %v340 = vpack.c.b16 %v272, %v238
  %v341 = vpack.c.b16 %v273, %v239
  %v342 = vpack.c.b16 %v274, %v240
  %v343 = vpack.c.b16 %v275, %v241
  %v344 = vpack.c.b16 %v276, %v242
  %v345 = vpack.c.b16 %v277, %v243
  %v346 = vpack.c.b16 %v278, %v244
  %v347 = vpack.c.b16 %v279, %v245
  %v348 = vpack.c.b16 %v280, %v246
  %v349 = vpack.c.b16 %v281, %v247
  %v350 = vpack.c.b16 %v282, %v248
  %v351 = vpack.c.b16 %v283, %v249
  %v352 = vpack.c.b16 %v284, %v250
  %v353 = vpack.c.b16 %v285, %v251
  %v354 = vpack.c.b16 %v286, %v252
  %v355 = vpack.c.b16 %v287, %v253
  %v356 = vpack.c.b16 %v288, %v254
  %v357 = vpack.c.b16 %v289, %v255
  %v358 = vpack.c.b16 %v290, %v256
  %v359 = vpack.c.b16 %v291, %v257
  %v360 = vpack.c.b16 %v292, %v258
  %v361 = vpack.c.b16 %v293, %v259
  %v362 = vpack.c.b16 %v294, %v260
  %v363 = vpack.c.b16 %v295, %v261
  %v364 = vpack.c.b16 %v296, %v262
  %v365 = vpack.c.b16 %v297, %v263
  %v366 = vpack.c.b16 %v298, %v264
  %v367 = vpack.c.b16 %v299, %v265
  %vm436 = vcmask 261120
  %v438 = vsel %vm436, %v21, 0
  %440 = vmatprep.subr.bf16.mxu0 %v301
  %441 = vmatpush1.bf16.msra.mxu0 %v300
  %442 = vmatprep.subr.bf16.mxu0 %v335
  %443 = vmatpush1.bf16.msra.mxu0 %v334
  %444 = vmatprep.subr.bf16.mxu0 0
  %445 = vmatpush1.bf16.msra.mxu0 0
  %446 = vmatprep.subr.bf16.mxu0 0
  %447 = vmatpush1.bf16.msra.mxu0 0
  %448 = vmatprep.subr.bf16.mxu0 0
  %449 = vmatpush1.bf16.msra.mxu0 0
  %450 = vmatprep.subr.bf16.mxu0 0
  %451 = vmatpush1.bf16.msra.mxu0 0
  %452 = vmatprep.subr.bf16.mxu0 0
  %453 = vmatpush1.bf16.msra.mxu0 0
  %454 = vmatprep.subr.bf16.mxu0 0
  %455 = vmatpush1.bf16.msra.mxu0 0
  %456 = vmatprep.subr.bf16.mxu0 0
  %457 = vmatpush1.bf16.msra.mxu0 0
  %458 = vmatprep.subr.bf16.mxu0 0
  %459 = vmatpush1.bf16.msra.mxu0 0
  %460 = vmatprep.subr.bf16.mxu0 0
  %461 = vmatpush1.bf16.msra.mxu0 0
  %462 = vmatprep.subr.bf16.mxu0 0
  %463 = vmatpush1.bf16.msra.mxu0 0
  %464 = vmatprep.subr.bf16.mxu0 0
  %465 = vmatpush1.bf16.msra.mxu0 0
  %466 = vmatprep.subr.bf16.mxu0 0
  %467 = vmatpush1.bf16.msra.mxu0 0
  %468 = vmatprep.subr.bf16.mxu0 0
  %469 = vmatpush1.bf16.msra.mxu0 0
  %470 = vmatprep.subr.bf16.mxu0 0
  %471 = vmatpush1.bf16.msra.mxu0 0
  %472 = vmatprep.mubr.bf16.mxu0 0
  %473 = vmatmul.mubr.bf16.gmra.mrb[0].mxu0 %v438
  %v474 = vpop.f32.mrb[0].mxu0
  %v475 = vadd.f32 %v94, %v474
  %v476 = vpop.f32.mrb[0].mxu0
  %v477 = vadd.f32 %v94, %v476
  %v478 = vpop.f32.mrb[0].mxu0
  %v479 = vpop.f32.mrb[0].mxu0
  %480 = vdwg.mxu0
  %481 = vmatprep.subr.bf16.mxu0 %v303
  %482 = vmatpush1.bf16.msra.mxu0 %v302
  %483 = vmatprep.subr.bf16.mxu0 %v337
  %484 = vmatpush1.bf16.msra.mxu0 %v336
  %485 = vmatprep.subr.bf16.mxu0 0
  %486 = vmatpush1.bf16.msra.mxu0 0
  %487 = vmatprep.subr.bf16.mxu0 0
  %488 = vmatpush1.bf16.msra.mxu0 0
  %489 = vmatprep.subr.bf16.mxu0 0
  %490 = vmatpush1.bf16.msra.mxu0 0
  %491 = vmatprep.subr.bf16.mxu0 0
  %492 = vmatpush1.bf16.msra.mxu0 0
  %493 = vmatprep.subr.bf16.mxu0 0
  %494 = vmatpush1.bf16.msra.mxu0 0
  %495 = vmatprep.subr.bf16.mxu0 0
  %496 = vmatpush1.bf16.msra.mxu0 0
  %497 = vmatprep.subr.bf16.mxu0 0
  %498 = vmatpush1.bf16.msra.mxu0 0
  %499 = vmatprep.subr.bf16.mxu0 0
  %500 = vmatpush1.bf16.msra.mxu0 0
  %501 = vmatprep.subr.bf16.mxu0 0
  %502 = vmatpush1.bf16.msra.mxu0 0
  %503 = vmatprep.subr.bf16.mxu0 0
  %504 = vmatpush1.bf16.msra.mxu0 0
  %505 = vmatprep.subr.bf16.mxu0 0
  %506 = vmatpush1.bf16.msra.mxu0 0
  %507 = vmatprep.subr.bf16.mxu0 0
  %508 = vmatpush1.bf16.msra.mxu0 0
  %509 = vmatprep.subr.bf16.mxu0 0
  %510 = vmatpush1.bf16.msra.mxu0 0
  %511 = vmatprep.subr.bf16.mxu0 0
  %512 = vmatpush1.bf16.msra.mxu0 0
  %513 = vmatprep.mubr.bf16.mxu0 0
  %514 = vmatmul.mubr.bf16.gmra.mrb[0].mxu0 %v438
  %v515 = vpop.f32.mrb[0].mxu0
  %v516 = vadd.f32 %v94, %v515
  %v517 = vpop.f32.mrb[0].mxu0
  %v518 = vadd.f32 %v94, %v517
  %v519 = vpop.f32.mrb[0].mxu0
  %v520 = vpop.f32.mrb[0].mxu0
  %521 = vdwg.mxu0
  %522 = vmatprep.subr.bf16.mxu0 %v305
  %523 = vmatpush1.bf16.msra.mxu0 %v304
  %524 = vmatprep.subr.bf16.mxu0 %v339
  %525 = vmatpush1.bf16.msra.mxu0 %v338
  %526 = vmatprep.subr.bf16.mxu0 0
  %527 = vmatpush1.bf16.msra.mxu0 0
  %528 = vmatprep.subr.bf16.mxu0 0
  %529 = vmatpush1.bf16.msra.mxu0 0
  %530 = vmatprep.subr.bf16.mxu0 0
  %531 = vmatpush1.bf16.msra.mxu0 0
  %532 = vmatprep.subr.bf16.mxu0 0
  %533 = vmatpush1.bf16.msra.mxu0 0
  %534 = vmatprep.subr.bf16.mxu0 0
  %535 = vmatpush1.bf16.msra.mxu0 0
  %536 = vmatprep.subr.bf16.mxu0 0
  %537 = vmatpush1.bf16.msra.mxu0 0
  %538 = vmatprep.subr.bf16.mxu0 0
  %539 = vmatpush1.bf16.msra.mxu0 0
  %540 = vmatprep.subr.bf16.mxu0 0
  %541 = vmatpush1.bf16.msra.mxu0 0
  %542 = vmatprep.subr.bf16.mxu0 0
  %543 = vmatpush1.bf16.msra.mxu0 0
  %544 = vmatprep.subr.bf16.mxu0 0
  %545 = vmatpush1.bf16.msra.mxu0 0
  %546 = vmatprep.subr.bf16.mxu0 0
  %547 = vmatpush1.bf16.msra.mxu0 0
  %548 = vmatprep.subr.bf16.mxu0 0
  %549 = vmatpush1.bf16.msra.mxu0 0
  %550 = vmatprep.subr.bf16.mxu0 0
  %551 = vmatpush1.bf16.msra.mxu0 0
  %552 = vmatprep.subr.bf16.mxu0 0
  %553 = vmatpush1.bf16.msra.mxu0 0
  %554 = vmatprep.mubr.bf16.mxu0 0
  %555 = vmatmul.mubr.bf16.gmra.mrb[0].mxu0 %v438
  %v556 = vpop.f32.mrb[0].mxu0
  %v557 = vadd.f32 %v94, %v556
  %v558 = vpop.f32.mrb[0].mxu0
  %v559 = vadd.f32 %v94, %v558
  %v560 = vpop.f32.mrb[0].mxu0
  %v561 = vpop.f32.mrb[0].mxu0
  %562 = vdwg.mxu0
  %563 = vmatprep.subr.bf16.mxu0 %v307
  %564 = vmatpush1.bf16.msra.mxu0 %v306
  %565 = vmatprep.subr.bf16.mxu0 %v341
  %566 = vmatpush1.bf16.msra.mxu0 %v340
  %567 = vmatprep.subr.bf16.mxu0 0
  %568 = vmatpush1.bf16.msra.mxu0 0
  %569 = vmatprep.subr.bf16.mxu0 0
  %570 = vmatpush1.bf16.msra.mxu0 0
  %571 = vmatprep.subr.bf16.mxu0 0
  %572 = vmatpush1.bf16.msra.mxu0 0
  %573 = vmatprep.subr.bf16.mxu0 0
  %574 = vmatpush1.bf16.msra.mxu0 0
  %575 = vmatprep.subr.bf16.mxu0 0
  %576 = vmatpush1.bf16.msra.mxu0 0
  %577 = vmatprep.subr.bf16.mxu0 0
  %578 = vmatpush1.bf16.msra.mxu0 0
  %579 = vmatprep.subr.bf16.mxu0 0
  %580 = vmatpush1.bf16.msra.mxu0 0
  %581 = vmatprep.subr.bf16.mxu0 0
  %582 = vmatpush1.bf16.msra.mxu0 0
  %583 = vmatprep.subr.bf16.mxu0 0
  %584 = vmatpush1.bf16.msra.mxu0 0
  %585 = vmatprep.subr.bf16.mxu0 0
  %586 = vmatpush1.bf16.msra.mxu0 0
  %587 = vmatprep.subr.bf16.mxu0 0
  %588 = vmatpush1.bf16.msra.mxu0 0
  %589 = vmatprep.subr.bf16.mxu0 0
  %590 = vmatpush1.bf16.msra.mxu0 0
  %591 = vmatprep.subr.bf16.mxu0 0
  %592 = vmatpush1.bf16.msra.mxu0 0
  %593 = vmatprep.subr.bf16.mxu0 0
  %594 = vmatpush1.bf16.msra.mxu0 0
  %595 = vmatprep.mubr.bf16.mxu0 0
  %596 = vmatmul.mubr.bf16.gmra.mrb[0].mxu0 %v438
  %v597 = vpop.f32.mrb[0].mxu0
  %v598 = vadd.f32 %v94, %v597
  %v599 = vpop.f32.mrb[0].mxu0
  %v600 = vadd.f32 %v94, %v599
  %v601 = vpop.f32.mrb[0].mxu0
  %v602 = vpop.f32.mrb[0].mxu0
  %603 = vdwg.mxu0
  %604 = vmatprep.subr.bf16.mxu0 %v309
  %605 = vmatpush1.bf16.msra.mxu0 %v308
  %606 = vmatprep.subr.bf16.mxu0 %v343
  %607 = vmatpush1.bf16.msra.mxu0 %v342
  %608 = vmatprep.subr.bf16.mxu0 0
  %609 = vmatpush1.bf16.msra.mxu0 0
  %610 = vmatprep.subr.bf16.mxu0 0
  %611 = vmatpush1.bf16.msra.mxu0 0
  %612 = vmatprep.subr.bf16.mxu0 0
  %613 = vmatpush1.bf16.msra.mxu0 0
  %614 = vmatprep.subr.bf16.mxu0 0
  %615 = vmatpush1.bf16.msra.mxu0 0
  %616 = vmatprep.subr.bf16.mxu0 0
  %617 = vmatpush1.bf16.msra.mxu0 0
  %618 = vmatprep.subr.bf16.mxu0 0
  %619 = vmatpush1.bf16.msra.mxu0 0
  %620 = vmatprep.subr.bf16.mxu0 0
  %621 = vmatpush1.bf16.msra.mxu0 0
  %622 = vmatprep.subr.bf16.mxu0 0
  %623 = vmatpush1.bf16.msra.mxu0 0
  %624 = vmatprep.subr.bf16.mxu0 0
  %625 = vmatpush1.bf16.msra.mxu0 0
  %626 = vmatprep.subr.bf16.mxu0 0
  %627 = vmatpush1.bf16.msra.mxu0 0
  %628 = vmatprep.subr.bf16.mxu0 0
  %629 = vmatpush1.bf16.msra.mxu0 0
  %630 = vmatprep.subr.bf16.mxu0 0
  %631 = vmatpush1.bf16.msra.mxu0 0
  %632 = vmatprep.subr.bf16.mxu0 0
  %633 = vmatpush1.bf16.msra.mxu0 0
  %634 = vmatprep.subr.bf16.mxu0 0
  %635 = vmatpush1.bf16.msra.mxu0 0
  %636 = vmatprep.mubr.bf16.mxu0 0
  %637 = vmatmul.mubr.bf16.gmra.mrb[0].mxu0 %v438
  %v638 = vpop.f32.mrb[0].mxu0
  %v639 = vadd.f32 %v94, %v638
  %v640 = vpop.f32.mrb[0].mxu0
  %v641 = vadd.f32 %v94, %v640
  %v642 = vpop.f32.mrb[0].mxu0
  %v643 = vpop.f32.mrb[0].mxu0
  %644 = vdwg.mxu0
  %645 = vmatprep.subr.bf16.mxu0 %v311
  %646 = vmatpush1.bf16.msra.mxu0 %v310
  %647 = vmatprep.subr.bf16.mxu0 %v345
  %648 = vmatpush1.bf16.msra.mxu0 %v344
  %649 = vmatprep.subr.bf16.mxu0 0
  %650 = vmatpush1.bf16.msra.mxu0 0
  %651 = vmatprep.subr.bf16.mxu0 0
  %652 = vmatpush1.bf16.msra.mxu0 0
  %653 = vmatprep.subr.bf16.mxu0 0
  %654 = vmatpush1.bf16.msra.mxu0 0
  %655 = vmatprep.subr.bf16.mxu0 0
  %656 = vmatpush1.bf16.msra.mxu0 0
  %657 = vmatprep.subr.bf16.mxu0 0
  %658 = vmatpush1.bf16.msra.mxu0 0
  %659 = vmatprep.subr.bf16.mxu0 0
  %660 = vmatpush1.bf16.msra.mxu0 0
  %661 = vmatprep.subr.bf16.mxu0 0
  %662 = vmatpush1.bf16.msra.mxu0 0
  %663 = vmatprep.subr.bf16.mxu0 0
  %664 = vmatpush1.bf16.msra.mxu0 0
  %665 = vmatprep.subr.bf16.mxu0 0
  %666 = vmatpush1.bf16.msra.mxu0 0
  %667 = vmatprep.subr.bf16.mxu0 0
  %668 = vmatpush1.bf16.msra.mxu0 0
  %669 = vmatprep.subr.bf16.mxu0 0
  %670 = vmatpush1.bf16.msra.mxu0 0
  %671 = vmatprep.subr.bf16.mxu0 0
  %672 = vmatpush1.bf16.msra.mxu0 0
  %673 = vmatprep.subr.bf16.mxu0 0
  %674 = vmatpush1.bf16.msra.mxu0 0
  %675 = vmatprep.subr.bf16.mxu0 0
  %676 = vmatpush1.bf16.msra.mxu0 0
  %677 = vmatprep.mubr.bf16.mxu0 0
  %678 = vmatmul.mubr.bf16.gmra.mrb[0].mxu0 %v438
  %v679 = vpop.f32.mrb[0].mxu0
  %v680 = vadd.f32 %v94, %v679
  %v681 = vpop.f32.mrb[0].mxu0
  %v682 = vadd.f32 %v94, %v681
  %v683 = vpop.f32.mrb[0].mxu0
  %v684 = vpop.f32.mrb[0].mxu0
  %685 = vdwg.mxu0
  %686 = vmatprep.subr.bf16.mxu0 %v313
  %687 = vmatpush1.bf16.msra.mxu0 %v312
  %688 = vmatprep.subr.bf16.mxu0 %v347
  %689 = vmatpush1.bf16.msra.mxu0 %v346
  %690 = vmatprep.subr.bf16.mxu0 0
  %691 = vmatpush1.bf16.msra.mxu0 0
  %692 = vmatprep.subr.bf16.mxu0 0
  %693 = vmatpush1.bf16.msra.mxu0 0
  %694 = vmatprep.subr.bf16.mxu0 0
  %695 = vmatpush1.bf16.msra.mxu0 0
  %696 = vmatprep.subr.bf16.mxu0 0
  %697 = vmatpush1.bf16.msra.mxu0 0
  %698 = vmatprep.subr.bf16.mxu0 0
  %699 = vmatpush1.bf16.msra.mxu0 0
  %700 = vmatprep.subr.bf16.mxu0 0
  %701 = vmatpush1.bf16.msra.mxu0 0
  %702 = vmatprep.subr.bf16.mxu0 0
  %703 = vmatpush1.bf16.msra.mxu0 0
  %704 = vmatprep.subr.bf16.mxu0 0
  %705 = vmatpush1.bf16.msra.mxu0 0
  %706 = vmatprep.subr.bf16.mxu0 0
  %707 = vmatpush1.bf16.msra.mxu0 0
  %708 = vmatprep.subr.bf16.mxu0 0
  %709 = vmatpush1.bf16.msra.mxu0 0
  %710 = vmatprep.subr.bf16.mxu0 0
  %711 = vmatpush1.bf16.msra.mxu0 0
  %712 = vmatprep.subr.bf16.mxu0 0
  %713 = vmatpush1.bf16.msra.mxu0 0
  %714 = vmatprep.subr.bf16.mxu0 0
  %715 = vmatpush1.bf16.msra.mxu0 0
  %716 = vmatprep.subr.bf16.mxu0 0
  %717 = vmatpush1.bf16.msra.mxu0 0
  %718 = vmatprep.mubr.bf16.mxu0 0
  %719 = vmatmul.mubr.bf16.gmra.mrb[0].mxu0 %v438
  %v720 = vpop.f32.mrb[0].mxu0
  %v721 = vadd.f32 %v94, %v720
  %v722 = vpop.f32.mrb[0].mxu0
  %v723 = vadd.f32 %v94, %v722
  %v724 = vpop.f32.mrb[0].mxu0
  %v725 = vpop.f32.mrb[0].mxu0
  %726 = vdwg.mxu0
  %727 = vmatprep.subr.bf16.mxu0 %v315
  %728 = vmatpush1.bf16.msra.mxu0 %v314
  %729 = vmatprep.subr.bf16.mxu0 %v349
  %730 = vmatpush1.bf16.msra.mxu0 %v348
  %731 = vmatprep.subr.bf16.mxu0 0
  %732 = vmatpush1.bf16.msra.mxu0 0
  %733 = vmatprep.subr.bf16.mxu0 0
  %734 = vmatpush1.bf16.msra.mxu0 0
  %735 = vmatprep.subr.bf16.mxu0 0
  %736 = vmatpush1.bf16.msra.mxu0 0
  %737 = vmatprep.subr.bf16.mxu0 0
  %738 = vmatpush1.bf16.msra.mxu0 0
  %739 = vmatprep.subr.bf16.mxu0 0
  %740 = vmatpush1.bf16.msra.mxu0 0
  %741 = vmatprep.subr.bf16.mxu0 0
  %742 = vmatpush1.bf16.msra.mxu0 0
  %743 = vmatprep.subr.bf16.mxu0 0
  %744 = vmatpush1.bf16.msra.mxu0 0
  %745 = vmatprep.subr.bf16.mxu0 0
  %746 = vmatpush1.bf16.msra.mxu0 0
  %747 = vmatprep.subr.bf16.mxu0 0
  %748 = vmatpush1.bf16.msra.mxu0 0
  %749 = vmatprep.subr.bf16.mxu0 0
  %750 = vmatpush1.bf16.msra.mxu0 0
  %751 = vmatprep.subr.bf16.mxu0 0
  %752 = vmatpush1.bf16.msra.mxu0 0
  %753 = vmatprep.subr.bf16.mxu0 0
  %754 = vmatpush1.bf16.msra.mxu0 0
  %755 = vmatprep.subr.bf16.mxu0 0
  %756 = vmatpush1.bf16.msra.mxu0 0
  %757 = vmatprep.subr.bf16.mxu0 0
  %758 = vmatpush1.bf16.msra.mxu0 0
  %759 = vmatprep.mubr.bf16.mxu0 0
  %760 = vmatmul.mubr.bf16.gmra.mrb[0].mxu0 %v438
  %v761 = vpop.f32.mrb[0].mxu0
  %v762 = vadd.f32 %v94, %v761
  %v763 = vpop.f32.mrb[0].mxu0
  %v764 = vadd.f32 %v94, %v763
  %v765 = vpop.f32.mrb[0].mxu0
  %v766 = vpop.f32.mrb[0].mxu0
  %767 = vdwg.mxu0
  %768 = vmatprep.subr.bf16.mxu0 %v317
  %769 = vmatpush1.bf16.msra.mxu0 %v316
  %770 = vmatprep.subr.bf16.mxu0 %v351
  %771 = vmatpush1.bf16.msra.mxu0 %v350
  %772 = vmatprep.subr.bf16.mxu0 0
  %773 = vmatpush1.bf16.msra.mxu0 0
  %774 = vmatprep.subr.bf16.mxu0 0
  %775 = vmatpush1.bf16.msra.mxu0 0
  %776 = vmatprep.subr.bf16.mxu0 0
  %777 = vmatpush1.bf16.msra.mxu0 0
  %778 = vmatprep.subr.bf16.mxu0 0
  %779 = vmatpush1.bf16.msra.mxu0 0
  %780 = vmatprep.subr.bf16.mxu0 0
  %781 = vmatpush1.bf16.msra.mxu0 0
  %782 = vmatprep.subr.bf16.mxu0 0
  %783 = vmatpush1.bf16.msra.mxu0 0
  %784 = vmatprep.subr.bf16.mxu0 0
  %785 = vmatpush1.bf16.msra.mxu0 0
  %786 = vmatprep.subr.bf16.mxu0 0
  %787 = vmatpush1.bf16.msra.mxu0 0
  %788 = vmatprep.subr.bf16.mxu0 0
  %789 = vmatpush1.bf16.msra.mxu0 0
  %790 = vmatprep.subr.bf16.mxu0 0
  %791 = vmatpush1.bf16.msra.mxu0 0
  %792 = vmatprep.subr.bf16.mxu0 0
  %793 = vmatpush1.bf16.msra.mxu0 0
  %794 = vmatprep.subr.bf16.mxu0 0
  %795 = vmatpush1.bf16.msra.mxu0 0
  %796 = vmatprep.subr.bf16.mxu0 0
  %797 = vmatpush1.bf16.msra.mxu0 0
  %798 = vmatprep.subr.bf16.mxu0 0
  %799 = vmatpush1.bf16.msra.mxu0 0
  %800 = vmatprep.mubr.bf16.mxu0 0
  %801 = vmatmul.mubr.bf16.gmra.mrb[0].mxu0 %v438
  %v802 = vpop.f32.mrb[0].mxu0
  %v803 = vadd.f32 %v94, %v802
  %v804 = vpop.f32.mrb[0].mxu0
  %v805 = vadd.f32 %v94, %v804
  %v806 = vpop.f32.mrb[0].mxu0
  %v807 = vpop.f32.mrb[0].mxu0
  %808 = vdwg.mxu0
  %809 = vmatprep.subr.bf16.mxu0 %v319
  %810 = vmatpush1.bf16.msra.mxu0 %v318
  %811 = vmatprep.subr.bf16.mxu0 %v353
  %812 = vmatpush1.bf16.msra.mxu0 %v352
  %813 = vmatprep.subr.bf16.mxu0 0
  %814 = vmatpush1.bf16.msra.mxu0 0
  %815 = vmatprep.subr.bf16.mxu0 0
  %816 = vmatpush1.bf16.msra.mxu0 0
  %817 = vmatprep.subr.bf16.mxu0 0
  %818 = vmatpush1.bf16.msra.mxu0 0
  %819 = vmatprep.subr.bf16.mxu0 0
  %820 = vmatpush1.bf16.msra.mxu0 0
  %821 = vmatprep.subr.bf16.mxu0 0
  %822 = vmatpush1.bf16.msra.mxu0 0
  %823 = vmatprep.subr.bf16.mxu0 0
  %824 = vmatpush1.bf16.msra.mxu0 0
  %825 = vmatprep.subr.bf16.mxu0 0
  %826 = vmatpush1.bf16.msra.mxu0 0
  %827 = vmatprep.subr.bf16.mxu0 0
  %828 = vmatpush1.bf16.msra.mxu0 0
  %829 = vmatprep.subr.bf16.mxu0 0
  %830 = vmatpush1.bf16.msra.mxu0 0
  %831 = vmatprep.subr.bf16.mxu0 0
  %832 = vmatpush1.bf16.msra.mxu0 0
  %833 = vmatprep.subr.bf16.mxu0 0
  %834 = vmatpush1.bf16.msra.mxu0 0
  %835 = vmatprep.subr.bf16.mxu0 0
  %836 = vmatpush1.bf16.msra.mxu0 0
  %837 = vmatprep.subr.bf16.mxu0 0
  %838 = vmatpush1.bf16.msra.mxu0 0
  %839 = vmatprep.subr.bf16.mxu0 0
  %840 = vmatpush1.bf16.msra.mxu0 0
  %841 = vmatprep.mubr.bf16.mxu0 0
  %842 = vmatmul.mubr.bf16.gmra.mrb[0].mxu0 %v438
  %v843 = vpop.f32.mrb[0].mxu0
  %v844 = vadd.f32 %v94, %v843
  %v845 = vpop.f32.mrb[0].mxu0
  %v846 = vadd.f32 %v94, %v845
  %v847 = vpop.f32.mrb[0].mxu0
  %v848 = vpop.f32.mrb[0].mxu0
  %849 = vdwg.mxu0
  %850 = vmatprep.subr.bf16.mxu0 %v321
  %851 = vmatpush1.bf16.msra.mxu0 %v320
  %852 = vmatprep.subr.bf16.mxu0 %v355
  %853 = vmatpush1.bf16.msra.mxu0 %v354
  %854 = vmatprep.subr.bf16.mxu0 0
  %855 = vmatpush1.bf16.msra.mxu0 0
  %856 = vmatprep.subr.bf16.mxu0 0
  %857 = vmatpush1.bf16.msra.mxu0 0
  %858 = vmatprep.subr.bf16.mxu0 0
  %859 = vmatpush1.bf16.msra.mxu0 0
  %860 = vmatprep.subr.bf16.mxu0 0
  %861 = vmatpush1.bf16.msra.mxu0 0
  %862 = vmatprep.subr.bf16.mxu0 0
  %863 = vmatpush1.bf16.msra.mxu0 0
  %864 = vmatprep.subr.bf16.mxu0 0
  %865 = vmatpush1.bf16.msra.mxu0 0
  %866 = vmatprep.subr.bf16.mxu0 0
  %867 = vmatpush1.bf16.msra.mxu0 0
  %868 = vmatprep.subr.bf16.mxu0 0
  %869 = vmatpush1.bf16.msra.mxu0 0
  %870 = vmatprep.subr.bf16.mxu0 0
  %871 = vmatpush1.bf16.msra.mxu0 0
  %872 = vmatprep.subr.bf16.mxu0 0
  %873 = vmatpush1.bf16.msra.mxu0 0
  %874 = vmatprep.subr.bf16.mxu0 0
  %875 = vmatpush1.bf16.msra.mxu0 0
  %876 = vmatprep.subr.bf16.mxu0 0
  %877 = vmatpush1.bf16.msra.mxu0 0
  %878 = vmatprep.subr.bf16.mxu0 0
  %879 = vmatpush1.bf16.msra.mxu0 0
  %880 = vmatprep.subr.bf16.mxu0 0
  %881 = vmatpush1.bf16.msra.mxu0 0
  %882 = vmatprep.mubr.bf16.mxu0 0
  %883 = vmatmul.mubr.bf16.gmra.mrb[0].mxu0 %v438
  %v884 = vpop.f32.mrb[0].mxu0
  %v885 = vadd.f32 %v94, %v884
  %v886 = vpop.f32.mrb[0].mxu0
  %v887 = vadd.f32 %v94, %v886
  %v888 = vpop.f32.mrb[0].mxu0
  %v889 = vpop.f32.mrb[0].mxu0
  %890 = vdwg.mxu0
  %891 = vmatprep.subr.bf16.mxu0 %v323
  %892 = vmatpush1.bf16.msra.mxu0 %v322
  %893 = vmatprep.subr.bf16.mxu0 %v357
  %894 = vmatpush1.bf16.msra.mxu0 %v356
  %895 = vmatprep.subr.bf16.mxu0 0
  %896 = vmatpush1.bf16.msra.mxu0 0
  %897 = vmatprep.subr.bf16.mxu0 0
  %898 = vmatpush1.bf16.msra.mxu0 0
  %899 = vmatprep.subr.bf16.mxu0 0
  %900 = vmatpush1.bf16.msra.mxu0 0
  %901 = vmatprep.subr.bf16.mxu0 0
  %902 = vmatpush1.bf16.msra.mxu0 0
  %903 = vmatprep.subr.bf16.mxu0 0
  %904 = vmatpush1.bf16.msra.mxu0 0
  %905 = vmatprep.subr.bf16.mxu0 0
  %906 = vmatpush1.bf16.msra.mxu0 0
  %907 = vmatprep.subr.bf16.mxu0 0
  %908 = vmatpush1.bf16.msra.mxu0 0
  %909 = vmatprep.subr.bf16.mxu0 0
  %910 = vmatpush1.bf16.msra.mxu0 0
  %911 = vmatprep.subr.bf16.mxu0 0
  %912 = vmatpush1.bf16.msra.mxu0 0
  %913 = vmatprep.subr.bf16.mxu0 0
  %914 = vmatpush1.bf16.msra.mxu0 0
  %915 = vmatprep.subr.bf16.mxu0 0
  %916 = vmatpush1.bf16.msra.mxu0 0
  %917 = vmatprep.subr.bf16.mxu0 0
  %918 = vmatpush1.bf16.msra.mxu0 0
  %919 = vmatprep.subr.bf16.mxu0 0
  %920 = vmatpush1.bf16.msra.mxu0 0
  %921 = vmatprep.subr.bf16.mxu0 0
  %922 = vmatpush1.bf16.msra.mxu0 0
  %923 = vmatprep.mubr.bf16.mxu0 0
  %924 = vmatmul.mubr.bf16.gmra.mrb[0].mxu0 %v438
  %v925 = vpop.f32.mrb[0].mxu0
  %v926 = vadd.f32 %v94, %v925
  %v927 = vpop.f32.mrb[0].mxu0
  %v928 = vadd.f32 %v94, %v927
  %v929 = vpop.f32.mrb[0].mxu0
  %v930 = vpop.f32.mrb[0].mxu0
  %931 = vdwg.mxu0
  %932 = vmatprep.subr.bf16.mxu0 %v325
  %933 = vmatpush1.bf16.msra.mxu0 %v324
  %934 = vmatprep.subr.bf16.mxu0 %v359
  %935 = vmatpush1.bf16.msra.mxu0 %v358
  %936 = vmatprep.subr.bf16.mxu0 0
  %937 = vmatpush1.bf16.msra.mxu0 0
  %938 = vmatprep.subr.bf16.mxu0 0
  %939 = vmatpush1.bf16.msra.mxu0 0
  %940 = vmatprep.subr.bf16.mxu0 0
  %941 = vmatpush1.bf16.msra.mxu0 0
  %942 = vmatprep.subr.bf16.mxu0 0
  %943 = vmatpush1.bf16.msra.mxu0 0
  %944 = vmatprep.subr.bf16.mxu0 0
  %945 = vmatpush1.bf16.msra.mxu0 0
  %946 = vmatprep.subr.bf16.mxu0 0
  %947 = vmatpush1.bf16.msra.mxu0 0
  %948 = vmatprep.subr.bf16.mxu0 0
  %949 = vmatpush1.bf16.msra.mxu0 0
  %950 = vmatprep.subr.bf16.mxu0 0
  %951 = vmatpush1.bf16.msra.mxu0 0
  %952 = vmatprep.subr.bf16.mxu0 0
  %953 = vmatpush1.bf16.msra.mxu0 0
  %954 = vmatprep.subr.bf16.mxu0 0
  %955 = vmatpush1.bf16.msra.mxu0 0
  %956 = vmatprep.subr.bf16.mxu0 0
  %957 = vmatpush1.bf16.msra.mxu0 0
  %958 = vmatprep.subr.bf16.mxu0 0
  %959 = vmatpush1.bf16.msra.mxu0 0
  %960 = vmatprep.subr.bf16.mxu0 0
  %961 = vmatpush1.bf16.msra.mxu0 0
  %962 = vmatprep.subr.bf16.mxu0 0
  %963 = vmatpush1.bf16.msra.mxu0 0
  %964 = vmatprep.mubr.bf16.mxu0 0
  %965 = vmatmul.mubr.bf16.gmra.mrb[0].mxu0 %v438
  %v966 = vpop.f32.mrb[0].mxu0
  %v967 = vadd.f32 %v94, %v966
  %v968 = vpop.f32.mrb[0].mxu0
  %v969 = vadd.f32 %v94, %v968
  %v970 = vpop.f32.mrb[0].mxu0
  %v971 = vpop.f32.mrb[0].mxu0
  %972 = vdwg.mxu0
  %973 = vmatprep.subr.bf16.mxu0 %v327
  %974 = vmatpush1.bf16.msra.mxu0 %v326
  %975 = vmatprep.subr.bf16.mxu0 %v361
  %976 = vmatpush1.bf16.msra.mxu0 %v360
  %977 = vmatprep.subr.bf16.mxu0 0
  %978 = vmatpush1.bf16.msra.mxu0 0
  %979 = vmatprep.subr.bf16.mxu0 0
  %980 = vmatpush1.bf16.msra.mxu0 0
  %981 = vmatprep.subr.bf16.mxu0 0
  %982 = vmatpush1.bf16.msra.mxu0 0
  %983 = vmatprep.subr.bf16.mxu0 0
  %984 = vmatpush1.bf16.msra.mxu0 0
  %985 = vmatprep.subr.bf16.mxu0 0
  %986 = vmatpush1.bf16.msra.mxu0 0
  %987 = vmatprep.subr.bf16.mxu0 0
  %988 = vmatpush1.bf16.msra.mxu0 0
  %989 = vmatprep.subr.bf16.mxu0 0
  %990 = vmatpush1.bf16.msra.mxu0 0
  %991 = vmatprep.subr.bf16.mxu0 0
  %992 = vmatpush1.bf16.msra.mxu0 0
  %993 = vmatprep.subr.bf16.mxu0 0
  %994 = vmatpush1.bf16.msra.mxu0 0
  %995 = vmatprep.subr.bf16.mxu0 0
  %996 = vmatpush1.bf16.msra.mxu0 0
  %997 = vmatprep.subr.bf16.mxu0 0
  %998 = vmatpush1.bf16.msra.mxu0 0
  %999 = vmatprep.subr.bf16.mxu0 0
  %1000 = vmatpush1.bf16.msra.mxu0 0
  %1001 = vmatprep.subr.bf16.mxu0 0
  %1002 = vmatpush1.bf16.msra.mxu0 0
  %1003 = vmatprep.subr.bf16.mxu0 0
  %1004 = vmatpush1.bf16.msra.mxu0 0
  %1005 = vmatprep.mubr.bf16.mxu0 0
  %1006 = vmatmul.mubr.bf16.gmra.mrb[0].mxu0 %v438
  %v1007 = vpop.f32.mrb[0].mxu0
  %v1008 = vadd.f32 %v94, %v1007
  %v1009 = vpop.f32.mrb[0].mxu0
  %v1010 = vadd.f32 %v94, %v1009
  %v1011 = vpop.f32.mrb[0].mxu0
  %v1012 = vpop.f32.mrb[0].mxu0
  %1013 = vdwg.mxu0
  %1014 = vmatprep.subr.bf16.mxu0 %v329
  %1015 = vmatpush1.bf16.msra.mxu0 %v328
  %1016 = vmatprep.subr.bf16.mxu0 %v363
  %1017 = vmatpush1.bf16.msra.mxu0 %v362
  %1018 = vmatprep.subr.bf16.mxu0 0
  %1019 = vmatpush1.bf16.msra.mxu0 0
  %1020 = vmatprep.subr.bf16.mxu0 0
  %1021 = vmatpush1.bf16.msra.mxu0 0
  %1022 = vmatprep.subr.bf16.mxu0 0
  %1023 = vmatpush1.bf16.msra.mxu0 0
  %1024 = vmatprep.subr.bf16.mxu0 0
  %1025 = vmatpush1.bf16.msra.mxu0 0
  %1026 = vmatprep.subr.bf16.mxu0 0
  %1027 = vmatpush1.bf16.msra.mxu0 0
  %1028 = vmatprep.subr.bf16.mxu0 0
  %1029 = vmatpush1.bf16.msra.mxu0 0
  %1030 = vmatprep.subr.bf16.mxu0 0
  %1031 = vmatpush1.bf16.msra.mxu0 0
  %1032 = vmatprep.subr.bf16.mxu0 0
  %1033 = vmatpush1.bf16.msra.mxu0 0
  %1034 = vmatprep.subr.bf16.mxu0 0
  %1035 = vmatpush1.bf16.msra.mxu0 0
  %1036 = vmatprep.subr.bf16.mxu0 0
  %1037 = vmatpush1.bf16.msra.mxu0 0
  %1038 = vmatprep.subr.bf16.mxu0 0
  %1039 = vmatpush1.bf16.msra.mxu0 0
  %1040 = vmatprep.subr.bf16.mxu0 0
  %1041 = vmatpush1.bf16.msra.mxu0 0
  %1042 = vmatprep.subr.bf16.mxu0 0
  %1043 = vmatpush1.bf16.msra.mxu0 0
  %1044 = vmatprep.subr.bf16.mxu0 0
  %1045 = vmatpush1.bf16.msra.mxu0 0
  %1046 = vmatprep.mubr.bf16.mxu0 0
  %1047 = vmatmul.mubr.bf16.gmra.mrb[0].mxu0 %v438
  %v1048 = vpop.f32.mrb[0].mxu0
  %v1049 = vadd.f32 %v94, %v1048
  %v1050 = vpop.f32.mrb[0].mxu0
  %v1051 = vadd.f32 %v94, %v1050
  %v1052 = vpop.f32.mrb[0].mxu0
  %v1053 = vpop.f32.mrb[0].mxu0
  %1054 = vdwg.mxu0
  %1055 = vmatprep.subr.bf16.mxu0 %v331
  %1056 = vmatpush1.bf16.msra.mxu0 %v330
  %1057 = vmatprep.subr.bf16.mxu0 %v365
  %1058 = vmatpush1.bf16.msra.mxu0 %v364
  %1059 = vmatprep.subr.bf16.mxu0 0
  %1060 = vmatpush1.bf16.msra.mxu0 0
  %1061 = vmatprep.subr.bf16.mxu0 0
  %1062 = vmatpush1.bf16.msra.mxu0 0
  %1063 = vmatprep.subr.bf16.mxu0 0
  %1064 = vmatpush1.bf16.msra.mxu0 0
  %1065 = vmatprep.subr.bf16.mxu0 0
  %1066 = vmatpush1.bf16.msra.mxu0 0
  %1067 = vmatprep.subr.bf16.mxu0 0
  %1068 = vmatpush1.bf16.msra.mxu0 0
  %1069 = vmatprep.subr.bf16.mxu0 0
  %1070 = vmatpush1.bf16.msra.mxu0 0
  %1071 = vmatprep.subr.bf16.mxu0 0
  %1072 = vmatpush1.bf16.msra.mxu0 0
  %1073 = vmatprep.subr.bf16.mxu0 0
  %1074 = vmatpush1.bf16.msra.mxu0 0
  %1075 = vmatprep.subr.bf16.mxu0 0
  %1076 = vmatpush1.bf16.msra.mxu0 0
  %1077 = vmatprep.subr.bf16.mxu0 0
  %1078 = vmatpush1.bf16.msra.mxu0 0
  %1079 = vmatprep.subr.bf16.mxu0 0
  %1080 = vmatpush1.bf16.msra.mxu0 0
  %1081 = vmatprep.subr.bf16.mxu0 0
  %1082 = vmatpush1.bf16.msra.mxu0 0
  %1083 = vmatprep.subr.bf16.mxu0 0
  %1084 = vmatpush1.bf16.msra.mxu0 0
  %1085 = vmatprep.subr.bf16.mxu0 0
  %1086 = vmatpush1.bf16.msra.mxu0 0
  %1087 = vmatprep.mubr.bf16.mxu0 0
  %1088 = vmatmul.mubr.bf16.gmra.mrb[0].mxu0 %v438
  %v1089 = vpop.f32.mrb[0].mxu0
  %v1090 = vadd.f32 %v94, %v1089
  %v1091 = vpop.f32.mrb[0].mxu0
  %v1092 = vadd.f32 %v94, %v1091
  %v1093 = vpop.f32.mrb[0].mxu0
  %v1094 = vpop.f32.mrb[0].mxu0
  %1095 = vdwg.mxu0
  %1096 = vmatprep.subr.bf16.mxu0 %v333
  %1097 = vmatpush1.bf16.msra.mxu0 %v332
  %1098 = vmatprep.subr.bf16.mxu0 %v367
  %1099 = vmatpush1.bf16.msra.mxu0 %v366
  %1100 = vmatprep.subr.bf16.mxu0 0
  %1101 = vmatpush1.bf16.msra.mxu0 0
  %1102 = vmatprep.subr.bf16.mxu0 0
  %1103 = vmatpush1.bf16.msra.mxu0 0
  %1104 = vmatprep.subr.bf16.mxu0 0
  %1105 = vmatpush1.bf16.msra.mxu0 0
  %1106 = vmatprep.subr.bf16.mxu0 0
  %1107 = vmatpush1.bf16.msra.mxu0 0
  %1108 = vmatprep.subr.bf16.mxu0 0
  %1109 = vmatpush1.bf16.msra.mxu0 0
  %1110 = vmatprep.subr.bf16.mxu0 0
  %1111 = vmatpush1.bf16.msra.mxu0 0
  %1112 = vmatprep.subr.bf16.mxu0 0
  %1113 = vmatpush1.bf16.msra.mxu0 0
  %1114 = vmatprep.subr.bf16.mxu0 0
  %1115 = vmatpush1.bf16.msra.mxu0 0
  %1116 = vmatprep.subr.bf16.mxu0 0
  %1117 = vmatpush1.bf16.msra.mxu0 0
  %1118 = vmatprep.subr.bf16.mxu0 0
  %1119 = vmatpush1.bf16.msra.mxu0 0
  %1120 = vmatprep.subr.bf16.mxu0 0
  %1121 = vmatpush1.bf16.msra.mxu0 0
  %1122 = vmatprep.subr.bf16.mxu0 0
  %1123 = vmatpush1.bf16.msra.mxu0 0
  %1124 = vmatprep.subr.bf16.mxu0 0
  %1125 = vmatpush1.bf16.msra.mxu0 0
  %1126 = vmatprep.subr.bf16.mxu0 0
  %1127 = vmatpush1.bf16.msra.mxu0 0
  %1128 = vmatprep.mubr.bf16.mxu0 0
  %1129 = vmatmul.mubr.bf16.gmra.mrb[0].mxu0 %v438
  %v1130 = vpop.f32.mrb[0].mxu0
  %v1131 = vadd.f32 %v94, %v1130
  %v1132 = vpop.f32.mrb[0].mxu0
  %v1133 = vadd.f32 %v94, %v1132
  %v1134 = vpop.f32.mrb[0].mxu0
  %v1135 = vpop.f32.mrb[0].mxu0
  %1136 = vdwg.mxu0
  %v1137 = vmax.f32 %v475, 0.0
  %v1138 = vmax.f32 %v477, 0.0
  %v1139 = vmax.f32 %v516, 0.0
  %v1140 = vmax.f32 %v518, 0.0
  %v1141 = vmax.f32 %v557, 0.0
  %v1142 = vmax.f32 %v559, 0.0
  %v1143 = vmax.f32 %v598, 0.0
  %v1144 = vmax.f32 %v600, 0.0
  %v1145 = vmax.f32 %v639, 0.0
  %v1146 = vmax.f32 %v641, 0.0
  %v1147 = vmax.f32 %v680, 0.0
  %v1148 = vmax.f32 %v682, 0.0
  %v1149 = vmax.f32 %v721, 0.0
  %v1150 = vmax.f32 %v723, 0.0
  %v1151 = vmax.f32 %v762, 0.0
  %v1152 = vmax.f32 %v764, 0.0
  %v1153 = vmax.f32 %v803, 0.0
  %v1154 = vmax.f32 %v805, 0.0
  %v1155 = vmax.f32 %v844, 0.0
  %v1156 = vmax.f32 %v846, 0.0
  %v1157 = vmax.f32 %v885, 0.0
  %v1158 = vmax.f32 %v887, 0.0
  %v1159 = vmax.f32 %v926, 0.0
  %v1160 = vmax.f32 %v928, 0.0
  %v1161 = vmax.f32 %v967, 0.0
  %v1162 = vmax.f32 %v969, 0.0
  %v1163 = vmax.f32 %v1008, 0.0
  %v1164 = vmax.f32 %v1010, 0.0
  %v1165 = vmax.f32 %v1049, 0.0
  %v1166 = vmax.f32 %v1051, 0.0
  %v1167 = vmax.f32 %v1090, 0.0
  %v1168 = vmax.f32 %v1092, 0.0
  %v1169 = vmax.f32 %v1131, 0.0
  %v1170 = vmax.f32 %v1133, 0.0
  %v1171 = vlaneseq
  %v1172 = vand.u32 %v1171, 127
  %v1173 = vadd.s32 %v1172, 128
  %v1174 = vadd.s32 %v1172, 256
  %v1175 = vadd.s32 %v1172, 384
  %v1176 = vadd.s32 %v1172, 512
  %v1177 = vadd.s32 %v1172, 640
  %v1178 = vadd.s32 %v1172, 768
  %v1179 = vadd.s32 %v1172, 896
  %v1180 = vadd.s32 %v1172, 1024
  %v1181 = vadd.s32 %v1172, 1152
  %v1182 = vadd.s32 %v1172, 1280
  %v1183 = vadd.s32 %v1172, 1408
  %v1184 = vadd.s32 %v1172, 1536
  %v1185 = vadd.s32 %v1172, 1664
  %v1186 = vadd.s32 %v1172, 1792
  %v1187 = vadd.s32 %v1172, 1920
  %v1188 = vadd.s32 %v1172, 2048
  %v1189 = vadd.s32 %v1172, 2176
  %v1190 = vadd.s32 %v1172, 2304
  %v1191 = vadd.s32 %v1172, 2432
  %v1192 = vadd.s32 %v1172, 2560
  %v1193 = vadd.s32 %v1172, 2688
  %v1194 = vadd.s32 %v1172, 2816
  %v1195 = vadd.s32 %v1172, 2944
  %v1196 = vadd.s32 %v1172, 3072
  %v1197 = vadd.s32 %v1172, 3200
  %v1198 = vadd.s32 %v1172, 3328
  %v1199 = vadd.s32 %v1172, 3456
  %v1200 = vadd.s32 %v1172, 3584
  %v1201 = vadd.s32 %v1172, 3712
  %v1202 = vadd.s32 %v1172, 3840
  %v1203 = vadd.s32 %v1172, 3968
  %v1204 = vadd.s32 %v1172, 4096
  %v1205 = vadd.s32 %v1172, 4224
  %vm1206 = vcmp.lt.s32.totalorder %v1172, 4232
  %vm1207 = vcmp.lt.s32.totalorder %v1173, 4232
  %vm1208 = vcmp.lt.s32.totalorder %v1174, 4232
  %vm1209 = vcmp.lt.s32.totalorder %v1175, 4232
  %vm1210 = vcmp.lt.s32.totalorder %v1176, 4232
  %vm1211 = vcmp.lt.s32.totalorder %v1177, 4232
  %vm1212 = vcmp.lt.s32.totalorder %v1178, 4232
  %vm1213 = vcmp.lt.s32.totalorder %v1179, 4232
  %vm1214 = vcmp.lt.s32.totalorder %v1180, 4232
  %vm1215 = vcmp.lt.s32.totalorder %v1181, 4232
  %vm1216 = vcmp.lt.s32.totalorder %v1182, 4232
  %vm1217 = vcmp.lt.s32.totalorder %v1183, 4232
  %vm1218 = vcmp.lt.s32.totalorder %v1184, 4232
  %vm1219 = vcmp.lt.s32.totalorder %v1185, 4232
  %vm1220 = vcmp.lt.s32.totalorder %v1186, 4232
  %vm1221 = vcmp.lt.s32.totalorder %v1187, 4232
  %vm1222 = vcmp.lt.s32.totalorder %v1188, 4232
  %vm1223 = vcmp.lt.s32.totalorder %v1189, 4232
  %vm1224 = vcmp.lt.s32.totalorder %v1190, 4232
  %vm1225 = vcmp.lt.s32.totalorder %v1191, 4232
  %vm1226 = vcmp.lt.s32.totalorder %v1192, 4232
  %vm1227 = vcmp.lt.s32.totalorder %v1193, 4232
  %vm1228 = vcmp.lt.s32.totalorder %v1194, 4232
  %vm1229 = vcmp.lt.s32.totalorder %v1195, 4232
  %vm1230 = vcmp.lt.s32.totalorder %v1196, 4232
  %vm1231 = vcmp.lt.s32.totalorder %v1197, 4232
  %vm1232 = vcmp.lt.s32.totalorder %v1198, 4232
  %vm1233 = vcmp.lt.s32.totalorder %v1199, 4232
  %vm1234 = vcmp.lt.s32.totalorder %v1200, 4232
  %vm1235 = vcmp.lt.s32.totalorder %v1201, 4232
  %vm1236 = vcmp.lt.s32.totalorder %v1202, 4232
  %vm1237 = vcmp.lt.s32.totalorder %v1203, 4232
  %vm1238 = vcmp.lt.s32.totalorder %v1204, 4232
  %vm1239 = vcmp.lt.s32.totalorder %v1205, 4232
  %v1240 = vsel %vm1206, %v1137, 0.0
  %v1241 = vsel %vm1207, %v1138, 0.0
  %v1242 = vsel %vm1208, %v1139, 0.0
  %v1243 = vsel %vm1209, %v1140, 0.0
  %v1244 = vsel %vm1210, %v1141, 0.0
  %v1245 = vsel %vm1211, %v1142, 0.0
  %v1246 = vsel %vm1212, %v1143, 0.0
  %v1247 = vsel %vm1213, %v1144, 0.0
  %v1248 = vsel %vm1214, %v1145, 0.0
  %v1249 = vsel %vm1215, %v1146, 0.0
  %v1250 = vsel %vm1216, %v1147, 0.0
  %v1251 = vsel %vm1217, %v1148, 0.0
  %v1252 = vsel %vm1218, %v1149, 0.0
  %v1253 = vsel %vm1219, %v1150, 0.0
  %v1254 = vsel %vm1220, %v1151, 0.0
  %v1255 = vsel %vm1221, %v1152, 0.0
  %v1256 = vsel %vm1222, %v1153, 0.0
  %v1257 = vsel %vm1223, %v1154, 0.0
  %v1258 = vsel %vm1224, %v1155, 0.0
  %v1259 = vsel %vm1225, %v1156, 0.0
  %v1260 = vsel %vm1226, %v1157, 0.0
  %v1261 = vsel %vm1227, %v1158, 0.0
  %v1262 = vsel %vm1228, %v1159, 0.0
  %v1263 = vsel %vm1229, %v1160, 0.0
  %v1264 = vsel %vm1230, %v1161, 0.0
  %v1265 = vsel %vm1231, %v1162, 0.0
  %v1266 = vsel %vm1232, %v1163, 0.0
  %v1267 = vsel %vm1233, %v1164, 0.0
  %v1268 = vsel %vm1234, %v1165, 0.0
  %v1269 = vsel %vm1235, %v1166, 0.0
  %v1270 = vsel %vm1236, %v1167, 0.0
  %v1271 = vsel %vm1237, %v1168, 0.0
  %v1272 = vsel %vm1238, %v1169, 0.0
  %v1273 = vsel %vm1239, %v1170, 0.0
  %v1274 = vadd.f32 %v1240, %v1241
  %v1275 = vadd.f32 %v1274, %v1242
  %v1276 = vadd.f32 %v1275, %v1243
  %v1277 = vadd.f32 %v1276, %v1244
  %v1278 = vadd.f32 %v1277, %v1245
  %v1279 = vadd.f32 %v1278, %v1246
  %v1280 = vadd.f32 %v1279, %v1247
  %v1281 = vadd.f32 %v1280, %v1248
  %v1282 = vadd.f32 %v1281, %v1249
  %v1283 = vadd.f32 %v1282, %v1250
  %v1284 = vadd.f32 %v1283, %v1251
  %v1285 = vadd.f32 %v1284, %v1252
  %v1286 = vadd.f32 %v1285, %v1253
  %v1287 = vadd.f32 %v1286, %v1254
  %v1288 = vadd.f32 %v1287, %v1255
  %v1289 = vadd.f32 %v1288, %v1256
  %v1290 = vadd.f32 %v1289, %v1257
  %v1291 = vadd.f32 %v1290, %v1258
  %v1292 = vadd.f32 %v1291, %v1259
  %v1293 = vadd.f32 %v1292, %v1260
  %v1294 = vadd.f32 %v1293, %v1261
  %v1295 = vadd.f32 %v1294, %v1262
  %v1296 = vadd.f32 %v1295, %v1263
  %v1297 = vadd.f32 %v1296, %v1264
  %v1298 = vadd.f32 %v1297, %v1265
  %v1299 = vadd.f32 %v1298, %v1266
  %v1300 = vadd.f32 %v1299, %v1267
  %v1301 = vadd.f32 %v1300, %v1268
  %v1302 = vadd.f32 %v1301, %v1269
  %v1303 = vadd.f32 %v1302, %v1270
  %v1304 = vadd.f32 %v1303, %v1271
  %v1305 = vadd.f32 %v1304, %v1272
  %v1306 = vadd.f32 %v1305, %v1273
  %1307 = vadd.xlane.f32.xlu0 %v1306
  %v1308 = vpop.xlane.xlu0 %1307
  %v1309 = vrcp.pop 4232.0
  %v1310 = vmul.f32 %v1308, %v1309
  %v1311 = vsub.f32 %v1137, %v1310
  %v1312 = vsub.f32 %v1138, %v1310
  %v1313 = vsub.f32 %v1139, %v1310
  %v1314 = vsub.f32 %v1140, %v1310
  %v1315 = vsub.f32 %v1141, %v1310
  %v1316 = vsub.f32 %v1142, %v1310
  %v1317 = vsub.f32 %v1143, %v1310
  %v1318 = vsub.f32 %v1144, %v1310
  %v1319 = vsub.f32 %v1145, %v1310
  %v1320 = vsub.f32 %v1146, %v1310
  %v1321 = vsub.f32 %v1147, %v1310
  %v1322 = vsub.f32 %v1148, %v1310
  %v1323 = vsub.f32 %v1149, %v1310
  %v1324 = vsub.f32 %v1150, %v1310
  %v1325 = vsub.f32 %v1151, %v1310
  %v1326 = vsub.f32 %v1152, %v1310
  %v1327 = vsub.f32 %v1153, %v1310
  %v1328 = vsub.f32 %v1154, %v1310
  %v1329 = vsub.f32 %v1155, %v1310
  %v1330 = vsub.f32 %v1156, %v1310
  %v1331 = vsub.f32 %v1157, %v1310
  %v1332 = vsub.f32 %v1158, %v1310
  %v1333 = vsub.f32 %v1159, %v1310
  %v1334 = vsub.f32 %v1160, %v1310
  %v1335 = vsub.f32 %v1161, %v1310
  %v1336 = vsub.f32 %v1162, %v1310
  %v1337 = vsub.f32 %v1163, %v1310
  %v1338 = vsub.f32 %v1164, %v1310
  %v1339 = vsub.f32 %v1165, %v1310
  %v1340 = vsub.f32 %v1166, %v1310
  %v1341 = vsub.f32 %v1167, %v1310
  %v1342 = vsub.f32 %v1168, %v1310
  %v1343 = vsub.f32 %v1169, %v1310
  %v1344 = vsub.f32 %v1170, %v1310
  %v1345 = vsel %vm1206, %v1311, 0.0
  %v1346 = vsel %vm1207, %v1312, 0.0
  %v1347 = vsel %vm1208, %v1313, 0.0
  %v1348 = vsel %vm1209, %v1314, 0.0
  %v1349 = vsel %vm1210, %v1315, 0.0
  %v1350 = vsel %vm1211, %v1316, 0.0
  %v1351 = vsel %vm1212, %v1317, 0.0
  %v1352 = vsel %vm1213, %v1318, 0.0
  %v1353 = vsel %vm1214, %v1319, 0.0
  %v1354 = vsel %vm1215, %v1320, 0.0
  %v1355 = vsel %vm1216, %v1321, 0.0
  %v1356 = vsel %vm1217, %v1322, 0.0
  %v1357 = vsel %vm1218, %v1323, 0.0
  %v1358 = vsel %vm1219, %v1324, 0.0
  %v1359 = vsel %vm1220, %v1325, 0.0
  %v1360 = vsel %vm1221, %v1326, 0.0
  %v1361 = vsel %vm1222, %v1327, 0.0
  %v1362 = vsel %vm1223, %v1328, 0.0
  %v1363 = vsel %vm1224, %v1329, 0.0
  %v1364 = vsel %vm1225, %v1330, 0.0
  %v1365 = vsel %vm1226, %v1331, 0.0
  %v1366 = vsel %vm1227, %v1332, 0.0
  %v1367 = vsel %vm1228, %v1333, 0.0
  %v1368 = vsel %vm1229, %v1334, 0.0
  %v1369 = vsel %vm1230, %v1335, 0.0
  %v1370 = vsel %vm1231, %v1336, 0.0
  %v1371 = vsel %vm1232, %v1337, 0.0
  %v1372 = vsel %vm1233, %v1338, 0.0
  %v1373 = vsel %vm1234, %v1339, 0.0
  %v1374 = vsel %vm1235, %v1340, 0.0
  %v1375 = vsel %vm1236, %v1341, 0.0
  %v1376 = vsel %vm1237, %v1342, 0.0
  %v1377 = vsel %vm1238, %v1343, 0.0
  %v1378 = vsel %vm1239, %v1344, 0.0
  %v1379 = vmul.f32 %v1345, %v1345
  %v1380 = vmul.f32 %v1346, %v1346
  %v1381 = vmul.f32 %v1347, %v1347
  %v1382 = vmul.f32 %v1348, %v1348
  %v1383 = vmul.f32 %v1349, %v1349
  %v1384 = vmul.f32 %v1350, %v1350
  %v1385 = vmul.f32 %v1351, %v1351
  %v1386 = vmul.f32 %v1352, %v1352
  %v1387 = vmul.f32 %v1353, %v1353
  %v1388 = vmul.f32 %v1354, %v1354
  %v1389 = vmul.f32 %v1355, %v1355
  %v1390 = vmul.f32 %v1356, %v1356
  %v1391 = vmul.f32 %v1357, %v1357
  %v1392 = vmul.f32 %v1358, %v1358
  %v1393 = vmul.f32 %v1359, %v1359
  %v1394 = vmul.f32 %v1360, %v1360
  %v1395 = vmul.f32 %v1361, %v1361
  %v1396 = vmul.f32 %v1362, %v1362
  %v1397 = vmul.f32 %v1363, %v1363
  %v1398 = vmul.f32 %v1364, %v1364
  %v1399 = vmul.f32 %v1365, %v1365
  %v1400 = vmul.f32 %v1366, %v1366
  %v1401 = vmul.f32 %v1367, %v1367
  %v1402 = vmul.f32 %v1368, %v1368
  %v1403 = vmul.f32 %v1369, %v1369
  %v1404 = vmul.f32 %v1370, %v1370
  %v1405 = vmul.f32 %v1371, %v1371
  %v1406 = vmul.f32 %v1372, %v1372
  %v1407 = vmul.f32 %v1373, %v1373
  %v1408 = vmul.f32 %v1374, %v1374
  %v1409 = vmul.f32 %v1375, %v1375
  %v1410 = vmul.f32 %v1376, %v1376
  %v1411 = vmul.f32 %v1377, %v1377
  %v1412 = vmul.f32 %v1378, %v1378
  %v1413 = vadd.f32 %v1379, %v1380
  %v1414 = vadd.f32 %v1413, %v1381
  %v1415 = vadd.f32 %v1414, %v1382
  %v1416 = vadd.f32 %v1415, %v1383
  %v1417 = vadd.f32 %v1416, %v1384
  %v1418 = vadd.f32 %v1417, %v1385
  %v1419 = vadd.f32 %v1418, %v1386
  %v1420 = vadd.f32 %v1419, %v1387
  %v1421 = vadd.f32 %v1420, %v1388
  %v1422 = vadd.f32 %v1421, %v1389
  %v1423 = vadd.f32 %v1422, %v1390
  %v1424 = vadd.f32 %v1423, %v1391
  %v1425 = vadd.f32 %v1424, %v1392
  %v1426 = vadd.f32 %v1425, %v1393
  %v1427 = vadd.f32 %v1426, %v1394
  %v1428 = vadd.f32 %v1427, %v1395
  %v1429 = vadd.f32 %v1428, %v1396
  %v1430 = vadd.f32 %v1429, %v1397
  %v1431 = vadd.f32 %v1430, %v1398
  %v1432 = vadd.f32 %v1431, %v1399
  %v1433 = vadd.f32 %v1432, %v1400
  %v1434 = vadd.f32 %v1433, %v1401
  %v1435 = vadd.f32 %v1434, %v1402
  %v1436 = vadd.f32 %v1435, %v1403
  %v1437 = vadd.f32 %v1436, %v1404
  %v1438 = vadd.f32 %v1437, %v1405
  %v1439 = vadd.f32 %v1438, %v1406
  %v1440 = vadd.f32 %v1439, %v1407
  %v1441 = vadd.f32 %v1440, %v1408
  %v1442 = vadd.f32 %v1441, %v1409
  %v1443 = vadd.f32 %v1442, %v1410
  %v1444 = vadd.f32 %v1443, %v1411
  %v1445 = vadd.f32 %v1444, %v1412
  %1446 = vadd.xlane.f32.xlu0 %v1445
  %v1447 = vpop.xlane.xlu0 %1446
  %v1448 = vmul.f32 %v1447, %v1309
  %v1449 = vld [vmem:[%s3] sm:$0xff]
  %v1450 = vadd.f32 %v1448, 1e-05
  %v1451 = vrsqrt.pop %v1450
  %v1452 = vmul.f32 %v1449, %v1451
  %v1453 = vld [vmem:[%s4] sm:$0xff]
  %v1454 = vmul.f32 %v1310, %v1452
  %v1455 = vsub.f32 %v1453, %v1454
  %1457 = vset.pattern.permute.xlu0 0
  %1458 = vperm.xlu0 %1457, %v1452
  %v1459 = vpop.permute.xlu0 %1458
  %v1461 = vmul.f32 %v1137, %v1459
  %v1462 = vmul.f32 %v1138, %v1459
  %v1463 = vmul.f32 %v1139, %v1459
  %v1464 = vmul.f32 %v1140, %v1459
  %v1465 = vmul.f32 %v1141, %v1459
  %v1466 = vmul.f32 %v1142, %v1459
  %v1467 = vmul.f32 %v1143, %v1459
  %v1468 = vmul.f32 %v1144, %v1459
  %v1469 = vmul.f32 %v1145, %v1459
  %v1470 = vmul.f32 %v1146, %v1459
  %v1471 = vmul.f32 %v1147, %v1459
  %v1472 = vmul.f32 %v1148, %v1459
  %v1473 = vmul.f32 %v1149, %v1459
  %v1474 = vmul.f32 %v1150, %v1459
  %v1475 = vmul.f32 %v1151, %v1459
  %v1476 = vmul.f32 %v1152, %v1459
  %v1477 = vmul.f32 %v1153, %v1459
  %v1478 = vmul.f32 %v1154, %v1459
  %v1479 = vmul.f32 %v1155, %v1459
  %v1480 = vmul.f32 %v1156, %v1459
  %v1481 = vmul.f32 %v1157, %v1459
  %v1482 = vmul.f32 %v1158, %v1459
  %v1483 = vmul.f32 %v1159, %v1459
  %v1484 = vmul.f32 %v1160, %v1459
  %v1485 = vmul.f32 %v1161, %v1459
  %v1486 = vmul.f32 %v1162, %v1459
  %v1487 = vmul.f32 %v1163, %v1459
  %v1488 = vmul.f32 %v1164, %v1459
  %v1489 = vmul.f32 %v1165, %v1459
  %v1490 = vmul.f32 %v1166, %v1459
  %v1491 = vmul.f32 %v1167, %v1459
  %v1492 = vmul.f32 %v1168, %v1459
  %v1493 = vmul.f32 %v1169, %v1459
  %v1494 = vmul.f32 %v1170, %v1459
  %1496 = vset.pattern.permute.xlu0 0
  %1497 = vperm.xlu0 %1496, %v1455
  %v1498 = vpop.permute.xlu0 %1497
  %v1500 = vadd.f32 %v1461, %v1498
  %v1501 = vadd.f32 %v1462, %v1498
  %v1502 = vadd.f32 %v1463, %v1498
  %v1503 = vadd.f32 %v1464, %v1498
  %v1504 = vadd.f32 %v1465, %v1498
  %v1505 = vadd.f32 %v1466, %v1498
  %v1506 = vadd.f32 %v1467, %v1498
  %v1507 = vadd.f32 %v1468, %v1498
  %v1508 = vadd.f32 %v1469, %v1498
  %v1509 = vadd.f32 %v1470, %v1498
  %v1510 = vadd.f32 %v1471, %v1498
  %v1511 = vadd.f32 %v1472, %v1498
  %v1512 = vadd.f32 %v1473, %v1498
  %v1513 = vadd.f32 %v1474, %v1498
  %v1514 = vadd.f32 %v1475, %v1498
  %v1515 = vadd.f32 %v1476, %v1498
  %v1516 = vadd.f32 %v1477, %v1498
  %v1517 = vadd.f32 %v1478, %v1498
  %v1518 = vadd.f32 %v1479, %v1498
  %v1519 = vadd.f32 %v1480, %v1498
  %v1520 = vadd.f32 %v1481, %v1498
  %v1521 = vadd.f32 %v1482, %v1498
  %v1522 = vadd.f32 %v1483, %v1498
  %v1523 = vadd.f32 %v1484, %v1498
  %v1524 = vadd.f32 %v1485, %v1498
  %v1525 = vadd.f32 %v1486, %v1498
  %v1526 = vadd.f32 %v1487, %v1498
  %v1527 = vadd.f32 %v1488, %v1498
  %v1528 = vadd.f32 %v1489, %v1498
  %v1529 = vadd.f32 %v1490, %v1498
  %v1530 = vadd.f32 %v1491, %v1498
  %v1531 = vadd.f32 %v1492, %v1498
  %v1532 = vadd.f32 %v1493, %v1498
  %v1533 = vadd.f32 %v1494, %v1498
  %1534 = vst [vmem:[%s5] sm:$0xff] %v1500
  %1535 = vst [vmem:[%s5 + $0x8] sm:$0xff] %v1501
  %1536 = vst [vmem:[%s5 + $0x10] sm:$0xff] %v1502
  %1537 = vst [vmem:[%s5 + $0x18] sm:$0xff] %v1503
  %1538 = vst [vmem:[%s5 + $0x20] sm:$0xff] %v1504
  %1539 = vst [vmem:[%s5 + $0x28] sm:$0xff] %v1505
  %1540 = vst [vmem:[%s5 + $0x30] sm:$0xff] %v1506
  %1541 = vst [vmem:[%s5 + $0x38] sm:$0xff] %v1507
  %1542 = vst [vmem:[%s5 + $0x40] sm:$0xff] %v1508
  %1543 = vst [vmem:[%s5 + $0x48] sm:$0xff] %v1509
  %1544 = vst [vmem:[%s5 + $0x50] sm:$0xff] %v1510
  %1545 = vst [vmem:[%s5 + $0x58] sm:$0xff] %v1511
  %1546 = vst [vmem:[%s5 + $0x60] sm:$0xff] %v1512
  %1547 = vst [vmem:[%s5 + $0x68] sm:$0xff] %v1513
  %1548 = vst [vmem:[%s5 + $0x70] sm:$0xff] %v1514
  %1549 = vst [vmem:[%s5 + $0x78] sm:$0xff] %v1515
  %1550 = vst [vmem:[%s5 + $0x80] sm:$0xff] %v1516
  %1551 = vst [vmem:[%s5 + $0x88] sm:$0xff] %v1517
  %1552 = vst [vmem:[%s5 + $0x90] sm:$0xff] %v1518
  %1553 = vst [vmem:[%s5 + $0x98] sm:$0xff] %v1519
  %1554 = vst [vmem:[%s5 + $0xa0] sm:$0xff] %v1520
  %1555 = vst [vmem:[%s5 + $0xa8] sm:$0xff] %v1521
  %1556 = vst [vmem:[%s5 + $0xb0] sm:$0xff] %v1522
  %1557 = vst [vmem:[%s5 + $0xb8] sm:$0xff] %v1523
  %1558 = vst [vmem:[%s5 + $0xc0] sm:$0xff] %v1524
  %1559 = vst [vmem:[%s5 + $0xc8] sm:$0xff] %v1525
  %1560 = vst [vmem:[%s5 + $0xd0] sm:$0xff] %v1526
  %1561 = vst [vmem:[%s5 + $0xd8] sm:$0xff] %v1527
  %1562 = vst [vmem:[%s5 + $0xe0] sm:$0xff] %v1528
  %1563 = vst [vmem:[%s5 + $0xe8] sm:$0xff] %v1529
  %1564 = vst [vmem:[%s5 + $0xf0] sm:$0xff] %v1530
  %1565 = vst [vmem:[%s5 + $0xf8] sm:$0xff] %v1531
  %1566 = vst [vmem:[%s5 + $0x100] sm:$0xff] %v1532
  %1567 = vst [vmem:[%s5 + $0x108] sm:$0xff] %v1533
  // Predicated region
  $region22: #{_forward_impl.4} parent=0 // pred_check
    _
  $region23: #{_forward_impl.4} parent=0 // pred_check_branch
    %1569 = sbr.rel (0) target = $region25
  $region24: #{_forward_impl.4} parent=0 // pred_region
    _
  $region25: #{_forward_impl.4} parent=0 // pred_fallthru
    _
  // Predicated region
  $region26: #{_forward_impl.4} parent=0 // pred_check
    _
  $region27: #{_forward_impl.4} parent=0 // pred_check_branch
    %1571 = sbr.rel (0) target = $region29
  $region28: #{_forward_impl.4} parent=0 // pred_region
    _
  $region29: #{_forward_impl.4} parent=0 // pred_fallthru
    _

// kernel: _forward_impl.5
$region0: #{_forward_impl.5}
  #allocation0 [shape = 'u32[]', space=smem, size = 0x4, offset = 0x4, fixed_abs, tag = 'smem constant byte address 0x4 - core index']
  #allocation1 [shape = 'u32[144,128]{1,0:T(1,128)}', space=vmem, size = 0x12000, scoped, tag = 'internal scratch']
  %s0 = inlined_call_operand.vmem [shape: bf16[8,80], index: 0, kind: input, shape index: {}]
  %s1 = inlined_call_operand.vmem [shape: bf16[80,896], index: 1, kind: input, shape index: {}]
  %s2 = inlined_call_operand.vmem [shape: f32[8,1], index: 2, kind: input, shape index: {}]
  %s3 = inlined_call_operand.vmem [shape: f32[8,1], index: 3, kind: input, shape index: {}]
  %s4 = inlined_call_operand.vmem [shape: f32[8,1], index: 4, kind: input, shape index: {}]
  %s5 = inlined_call_operand.vmem [shape: f32[8,896], index: 5, kind: output, shape index: {}]
  %s6 = sld [smem:[#allocation0]]
  $region30: #{_forward_impl.5} parent=0
    _
  %s8 = ssub.s32 1, %s6
  %s9 = scalar_select 0, %s8, %s6
  // Predicated region
  $region2: #{_forward_impl.5} parent=0 // pred_check
    _
  $region3: #{_forward_impl.5} parent=0 // pred_check_branch
    %11 = sbr.rel (0) target = $region5
  $region4: #{_forward_impl.5} parent=0 // pred_region
    _
  $region5: #{_forward_impl.5} parent=0 // pred_fallthru
    _
  // Predicated region
  $region6: #{_forward_impl.5} parent=0 // pred_check
    _
  $region7: #{_forward_impl.5} parent=0 // pred_check_branch
    %13 = sbr.rel (0) target = $region9
  $region8: #{_forward_impl.5} parent=0 // pred_region
    _
  $region9: #{_forward_impl.5} parent=0 // pred_fallthru
    _
  // Predicated region
  $region10: #{_forward_impl.5} parent=0 // pred_check
    _
  $region11: #{_forward_impl.5} parent=0 // pred_check_branch
    %15 = sbr.rel (0) target = $region13
  $region12: #{_forward_impl.5} parent=0 // pred_region
    _
  $region13: #{_forward_impl.5} parent=0 // pred_fallthru
    _
  // Predicated region
  $region14: #{_forward_impl.5} parent=0 // pred_check
    _
  $region15: #{_forward_impl.5} parent=0 // pred_check_branch
    %17 = sbr.rel (0) target = $region17
  $region16: #{_forward_impl.5} parent=0 // pred_region
    _
  $region17: #{_forward_impl.5} parent=0 // pred_fallthru
    _
  // Predicated region
  $region18: #{_forward_impl.5} parent=0 // pred_check
    _
  $region19: #{_forward_impl.5} parent=0 // pred_check_branch
    %19 = sbr.rel (0) target = $region21
  $region20: #{_forward_impl.5} parent=0 // pred_region
    _
  $region21: #{_forward_impl.5} parent=0 // pred_fallthru
    _
  %v21 = vld [vmem:[%s0] sm:$0xf]
  %v22 = vld [vmem:[%s1] sm:$0xff]
  %v23 = vld [vmem:[%s1 + $0x8] sm:$0xff]
  %v24 = vld [vmem:[%s1 + $0x10] sm:$0xff]
  %v25 = vld [vmem:[%s1 + $0x18] sm:$0xf]
  %v26 = vld [vmem:[%s1 + $0x1c] sm:$0xff]
  %v27 = vld [vmem:[%s1 + $0x24] sm:$0xff]
  %v28 = vld [vmem:[%s1 + $0x2c] sm:$0xff]
  %v29 = vld [vmem:[%s1 + $0x34] sm:$0xf]
  %v30 = vld [vmem:[%s1 + $0x38] sm:$0xff]
  %v31 = vld [vmem:[%s1 + $0x40] sm:$0xff]
  %v32 = vld [vmem:[%s1 + $0x48] sm:$0xff]
  %v33 = vld [vmem:[%s1 + $0x50] sm:$0xf]
  %v34 = vld [vmem:[%s1 + $0x54] sm:$0xff]
  %v35 = vld [vmem:[%s1 + $0x5c] sm:$0xff]
  %v36 = vld [vmem:[%s1 + $0x64] sm:$0xff]
  %v37 = vld [vmem:[%s1 + $0x6c] sm:$0xf]
  %v38 = vld [vmem:[%s1 + $0x70] sm:$0xff]
  %v39 = vld [vmem:[%s1 + $0x78] sm:$0xff]
  %v40 = vld [vmem:[%s1 + $0x80] sm:$0xff]
  %v41 = vld [vmem:[%s1 + $0x88] sm:$0xf]
  %v42 = vld [vmem:[%s1 + $0x8c] sm:$0xff]
  %v43 = vld [vmem:[%s1 + $0x94] sm:$0xff]
  %v44 = vld [vmem:[%s1 + $0x9c] sm:$0xff]
  %v45 = vld [vmem:[%s1 + $0xa4] sm:$0xf]
  %v46 = vld [vmem:[%s1 + $0xa8] sm:$0xff]
  %v47 = vld [vmem:[%s1 + $0xb0] sm:$0xff]
  %v48 = vld [vmem:[%s1 + $0xb8] sm:$0xff]
  %v49 = vld [vmem:[%s1 + $0xc0] sm:$0xf]
  %v50 = vld [vmem:[%s1 + $0xc4] sm:$0xff]
  %v51 = vld [vmem:[%s1 + $0xcc] sm:$0xff]
  %v52 = vld [vmem:[%s1 + $0xd4] sm:$0xff]
  %v53 = vld [vmem:[%s1 + $0xdc] sm:$0xf]
  %v54 = vld [vmem:[%s1 + $0xe0] sm:$0xff]
  %v55 = vld [vmem:[%s1 + $0xe8] sm:$0xff]
  %v56 = vld [vmem:[%s1 + $0xf0] sm:$0xff]
  %v57 = vld [vmem:[%s1 + $0xf8] sm:$0xf]
  %v58 = vld [vmem:[%s1 + $0xfc] sm:$0xff]
  %v59 = vld [vmem:[%s1 + $0x104] sm:$0xff]
  %v60 = vld [vmem:[%s1 + $0x10c] sm:$0xff]
  %v61 = vld [vmem:[%s1 + $0x114] sm:$0xf]
  %v62 = vld [vmem:[%s2] sm:$0xff]
  %64 = vset.pattern.permute.xlu0 0
  %65 = vperm.xlu0 %64, %v62
  %v66 = vpop.permute.xlu0 %65
  %v108 = vunpack.c.l.b16 %v22
  %v109 = vunpack.c.h.b16 %v22
  %v110 = vunpack.c.l.b16 %v23
  %v111 = vunpack.c.h.b16 %v23
  %v112 = vunpack.c.l.b16 %v24
  %v113 = vunpack.c.h.b16 %v24
  %v114 = vunpack.c.l.b16 %v25
  %v115 = vunpack.c.l.b16 %v26
  %v116 = vunpack.c.h.b16 %v26
  %v117 = vunpack.c.l.b16 %v27
  %v118 = vunpack.c.h.b16 %v27
  %v119 = vunpack.c.l.b16 %v28
  %v120 = vunpack.c.h.b16 %v28
  %v121 = vunpack.c.l.b16 %v29
  %v122 = vunpack.c.l.b16 %v30
  %v123 = vunpack.c.h.b16 %v30
  %v124 = vunpack.c.l.b16 %v31
  %v125 = vunpack.c.h.b16 %v31
  %v126 = vunpack.c.l.b16 %v32
  %v127 = vunpack.c.h.b16 %v32
  %v128 = vunpack.c.l.b16 %v33
  %v129 = vunpack.c.l.b16 %v34
  %v130 = vunpack.c.h.b16 %v34
  %v131 = vunpack.c.l.b16 %v35
  %v132 = vunpack.c.h.b16 %v35
  %v133 = vunpack.c.l.b16 %v36
  %v134 = vunpack.c.h.b16 %v36
  %v135 = vunpack.c.l.b16 %v37
  %v136 = vunpack.c.l.b16 %v38
  %v137 = vunpack.c.h.b16 %v38
  %v138 = vunpack.c.l.b16 %v39
  %v139 = vunpack.c.h.b16 %v39
  %v140 = vunpack.c.l.b16 %v40
  %v141 = vunpack.c.h.b16 %v40
  %v142 = vunpack.c.l.b16 %v41
  %v143 = vunpack.c.l.b16 %v42
  %v144 = vunpack.c.h.b16 %v42
  %v145 = vunpack.c.l.b16 %v43
  %v146 = vunpack.c.h.b16 %v43
  %v147 = vunpack.c.l.b16 %v44
  %v148 = vunpack.c.h.b16 %v44
  %v149 = vunpack.c.l.b16 %v45
  %v150 = vunpack.c.l.b16 %v46
  %v151 = vunpack.c.h.b16 %v46
  %v152 = vunpack.c.l.b16 %v47
  %v153 = vunpack.c.h.b16 %v47
  %v154 = vunpack.c.l.b16 %v48
  %v155 = vunpack.c.h.b16 %v48
  %v156 = vunpack.c.l.b16 %v49
  %v157 = vunpack.c.l.b16 %v50
  %v158 = vunpack.c.h.b16 %v50
  %v159 = vunpack.c.l.b16 %v51
  %v160 = vunpack.c.h.b16 %v51
  %v161 = vunpack.c.l.b16 %v52
  %v162 = vunpack.c.h.b16 %v52
  %v163 = vunpack.c.l.b16 %v53
  %v164 = vunpack.c.l.b16 %v54
  %v165 = vunpack.c.h.b16 %v54
  %v166 = vunpack.c.l.b16 %v55
  %v167 = vunpack.c.h.b16 %v55
  %v168 = vunpack.c.l.b16 %v56
  %v169 = vunpack.c.h.b16 %v56
  %v170 = vunpack.c.l.b16 %v57
  %v171 = vunpack.c.l.b16 %v58
  %v172 = vunpack.c.h.b16 %v58
  %v173 = vunpack.c.l.b16 %v59
  %v174 = vunpack.c.h.b16 %v59
  %v175 = vunpack.c.l.b16 %v60
  %v176 = vunpack.c.h.b16 %v60
  %v177 = vunpack.c.l.b16 %v61
  %v178 = vpack.c.b16 %v115, %v108
  %v179 = vpack.c.b16 %v116, %v109
  %v180 = vpack.c.b16 %v117, %v110
  %v181 = vpack.c.b16 %v118, %v111
  %v182 = vpack.c.b16 %v119, %v112
  %v183 = vpack.c.b16 %v120, %v113
  %v184 = vpack.c.b16 %v121, %v114
  %v185 = vpack.c.b16 %v129, %v122
  %v186 = vpack.c.b16 %v130, %v123
  %v187 = vpack.c.b16 %v131, %v124
  %v188 = vpack.c.b16 %v132, %v125
  %v189 = vpack.c.b16 %v133, %v126
  %v190 = vpack.c.b16 %v134, %v127
  %v191 = vpack.c.b16 %v135, %v128
  %v192 = vpack.c.b16 %v143, %v136
  %v193 = vpack.c.b16 %v144, %v137
  %v194 = vpack.c.b16 %v145, %v138
  %v195 = vpack.c.b16 %v146, %v139
  %v196 = vpack.c.b16 %v147, %v140
  %v197 = vpack.c.b16 %v148, %v141
  %v198 = vpack.c.b16 %v149, %v142
  %v199 = vpack.c.b16 %v157, %v150
  %v200 = vpack.c.b16 %v158, %v151
  %v201 = vpack.c.b16 %v159, %v152
  %v202 = vpack.c.b16 %v160, %v153
  %v203 = vpack.c.b16 %v161, %v154
  %v204 = vpack.c.b16 %v162, %v155
  %v205 = vpack.c.b16 %v163, %v156
  %v206 = vpack.c.b16 %v171, %v164
  %v207 = vpack.c.b16 %v172, %v165
  %v208 = vpack.c.b16 %v173, %v166
  %v209 = vpack.c.b16 %v174, %v167
  %v210 = vpack.c.b16 %v175, %v168
  %v211 = vpack.c.b16 %v176, %v169
  %v212 = vpack.c.b16 %v177, %v170
  %vm248 = vcmask 654336
  %v250 = vsel %vm248, %v21, 0
  %252 = vmatprep.subr.bf16.mxu0 %v179
  %253 = vmatpush1.bf16.msra.mxu0 %v178
  %254 = vmatprep.subr.bf16.mxu0 %v186
  %255 = vmatpush1.bf16.msra.mxu0 %v185
  %256 = vmatprep.subr.bf16.mxu0 %v193
  %257 = vmatpush1.bf16.msra.mxu0 %v192
  %258 = vmatprep.subr.bf16.mxu0 %v200
  %259 = vmatpush1.bf16.msra.mxu0 %v199
  %260 = vmatprep.subr.bf16.mxu0 %v207
  %261 = vmatpush1.bf16.msra.mxu0 %v206
  %262 = vmatprep.subr.bf16.mxu0 0
  %263 = vmatpush1.bf16.msra.mxu0 0
  %264 = vmatprep.subr.bf16.mxu0 0
  %265 = vmatpush1.bf16.msra.mxu0 0
  %266 = vmatprep.subr.bf16.mxu0 0
  %267 = vmatpush1.bf16.msra.mxu0 0
  %268 = vmatprep.subr.bf16.mxu0 0
  %269 = vmatpush1.bf16.msra.mxu0 0
  %270 = vmatprep.subr.bf16.mxu0 0
  %271 = vmatpush1.bf16.msra.mxu0 0
  %272 = vmatprep.subr.bf16.mxu0 0
  %273 = vmatpush1.bf16.msra.mxu0 0
  %274 = vmatprep.subr.bf16.mxu0 0
  %275 = vmatpush1.bf16.msra.mxu0 0
  %276 = vmatprep.subr.bf16.mxu0 0
  %277 = vmatpush1.bf16.msra.mxu0 0
  %278 = vmatprep.subr.bf16.mxu0 0
  %279 = vmatpush1.bf16.msra.mxu0 0
  %280 = vmatprep.subr.bf16.mxu0 0
  %281 = vmatpush1.bf16.msra.mxu0 0
  %282 = vmatprep.subr.bf16.mxu0 0
  %283 = vmatpush1.bf16.msra.mxu0 0
  %284 = vmatprep.mubr.bf16.mxu0 0
  %285 = vmatmul.mubr.bf16.gmra.mrb[0].mxu0 %v250
  %v286 = vpop.f32.mrb[0].mxu0
  %v287 = vadd.f32 %v66, %v286
  %v288 = vpop.f32.mrb[0].mxu0
  %v289 = vadd.f32 %v66, %v288
  %v290 = vpop.f32.mrb[0].mxu0
  %v291 = vpop.f32.mrb[0].mxu0
  %292 = vdwg.mxu0
  %293 = vmatprep.subr.bf16.mxu0 %v181
  %294 = vmatpush1.bf16.msra.mxu0 %v180
  %295 = vmatprep.subr.bf16.mxu0 %v188
  %296 = vmatpush1.bf16.msra.mxu0 %v187
  %297 = vmatprep.subr.bf16.mxu0 %v195
  %298 = vmatpush1.bf16.msra.mxu0 %v194
  %299 = vmatprep.subr.bf16.mxu0 %v202
  %300 = vmatpush1.bf16.msra.mxu0 %v201
  %301 = vmatprep.subr.bf16.mxu0 %v209
  %302 = vmatpush1.bf16.msra.mxu0 %v208
  %303 = vmatprep.subr.bf16.mxu0 0
  %304 = vmatpush1.bf16.msra.mxu0 0
  %305 = vmatprep.subr.bf16.mxu0 0
  %306 = vmatpush1.bf16.msra.mxu0 0
  %307 = vmatprep.subr.bf16.mxu0 0
  %308 = vmatpush1.bf16.msra.mxu0 0
  %309 = vmatprep.subr.bf16.mxu0 0
  %310 = vmatpush1.bf16.msra.mxu0 0
  %311 = vmatprep.subr.bf16.mxu0 0
  %312 = vmatpush1.bf16.msra.mxu0 0
  %313 = vmatprep.subr.bf16.mxu0 0
  %314 = vmatpush1.bf16.msra.mxu0 0
  %315 = vmatprep.subr.bf16.mxu0 0
  %316 = vmatpush1.bf16.msra.mxu0 0
  %317 = vmatprep.subr.bf16.mxu0 0
  %318 = vmatpush1.bf16.msra.mxu0 0
  %319 = vmatprep.subr.bf16.mxu0 0
  %320 = vmatpush1.bf16.msra.mxu0 0
  %321 = vmatprep.subr.bf16.mxu0 0
  %322 = vmatpush1.bf16.msra.mxu0 0
  %323 = vmatprep.subr.bf16.mxu0 0
  %324 = vmatpush1.bf16.msra.mxu0 0
  %325 = vmatprep.mubr.bf16.mxu0 0
  %326 = vmatmul.mubr.bf16.gmra.mrb[0].mxu0 %v250
  %v327 = vpop.f32.mrb[0].mxu0
  %v328 = vadd.f32 %v66, %v327
  %v329 = vpop.f32.mrb[0].mxu0
  %v330 = vadd.f32 %v66, %v329
  %v331 = vpop.f32.mrb[0].mxu0
  %v332 = vpop.f32.mrb[0].mxu0
  %333 = vdwg.mxu0
  %334 = vmatprep.subr.bf16.mxu0 %v183
  %335 = vmatpush1.bf16.msra.mxu0 %v182
  %336 = vmatprep.subr.bf16.mxu0 %v190
  %337 = vmatpush1.bf16.msra.mxu0 %v189
  %338 = vmatprep.subr.bf16.mxu0 %v197
  %339 = vmatpush1.bf16.msra.mxu0 %v196
  %340 = vmatprep.subr.bf16.mxu0 %v204
  %341 = vmatpush1.bf16.msra.mxu0 %v203
  %342 = vmatprep.subr.bf16.mxu0 %v211
  %343 = vmatpush1.bf16.msra.mxu0 %v210
  %344 = vmatprep.subr.bf16.mxu0 0
  %345 = vmatpush1.bf16.msra.mxu0 0
  %346 = vmatprep.subr.bf16.mxu0 0
  %347 = vmatpush1.bf16.msra.mxu0 0
  %348 = vmatprep.subr.bf16.mxu0 0
  %349 = vmatpush1.bf16.msra.mxu0 0
  %350 = vmatprep.subr.bf16.mxu0 0
  %351 = vmatpush1.bf16.msra.mxu0 0
  %352 = vmatprep.subr.bf16.mxu0 0
  %353 = vmatpush1.bf16.msra.mxu0 0
  %354 = vmatprep.subr.bf16.mxu0 0
  %355 = vmatpush1.bf16.msra.mxu0 0
  %356 = vmatprep.subr.bf16.mxu0 0
  %357 = vmatpush1.bf16.msra.mxu0 0
  %358 = vmatprep.subr.bf16.mxu0 0
  %359 = vmatpush1.bf16.msra.mxu0 0
  %360 = vmatprep.subr.bf16.mxu0 0
  %361 = vmatpush1.bf16.msra.mxu0 0
  %362 = vmatprep.subr.bf16.mxu0 0
  %363 = vmatpush1.bf16.msra.mxu0 0
  %364 = vmatprep.subr.bf16.mxu0 0
  %365 = vmatpush1.bf16.msra.mxu0 0
  %366 = vmatprep.mubr.bf16.mxu0 0
  %367 = vmatmul.mubr.bf16.gmra.mrb[0].mxu0 %v250
  %v368 = vpop.f32.mrb[0].mxu0
  %v369 = vadd.f32 %v66, %v368
  %v370 = vpop.f32.mrb[0].mxu0
  %v371 = vadd.f32 %v66, %v370
  %v372 = vpop.f32.mrb[0].mxu0
  %v373 = vpop.f32.mrb[0].mxu0
  %374 = vdwg.mxu0
  %375 = vmatprep.subr.bf16.mxu0 0
  %376 = vmatpush1.bf16.msra.mxu0 %v184
  %377 = vmatprep.subr.bf16.mxu0 0
  %378 = vmatpush1.bf16.msra.mxu0 %v191
  %379 = vmatprep.subr.bf16.mxu0 0
  %380 = vmatpush1.bf16.msra.mxu0 %v198
  %381 = vmatprep.subr.bf16.mxu0 0
  %382 = vmatpush1.bf16.msra.mxu0 %v205
  %383 = vmatprep.subr.bf16.mxu0 0
  %384 = vmatpush1.bf16.msra.mxu0 %v212
  %385 = vmatprep.subr.bf16.mxu0 0
  %386 = vmatpush1.bf16.msra.mxu0 0
  %387 = vmatprep.subr.bf16.mxu0 0
  %388 = vmatpush1.bf16.msra.mxu0 0
  %389 = vmatprep.subr.bf16.mxu0 0
  %390 = vmatpush1.bf16.msra.mxu0 0
  %391 = vmatprep.subr.bf16.mxu0 0
  %392 = vmatpush1.bf16.msra.mxu0 0
  %393 = vmatprep.subr.bf16.mxu0 0
  %394 = vmatpush1.bf16.msra.mxu0 0
  %395 = vmatprep.subr.bf16.mxu0 0
  %396 = vmatpush1.bf16.msra.mxu0 0
  %397 = vmatprep.subr.bf16.mxu0 0
  %398 = vmatpush1.bf16.msra.mxu0 0
  %399 = vmatprep.subr.bf16.mxu0 0
  %400 = vmatpush1.bf16.msra.mxu0 0
  %401 = vmatprep.subr.bf16.mxu0 0
  %402 = vmatpush1.bf16.msra.mxu0 0
  %403 = vmatprep.subr.bf16.mxu0 0
  %404 = vmatpush1.bf16.msra.mxu0 0
  %405 = vmatprep.subr.bf16.mxu0 0
  %406 = vmatpush1.bf16.msra.mxu0 0
  %407 = vmatprep.mubr.bf16.mxu0 0
  %408 = vmatmul.mubr.bf16.gmra.mrb[0].mxu0 %v250
  %v409 = vpop.f32.mrb[0].mxu0
  %v410 = vadd.f32 %v66, %v409
  %v411 = vpop.f32.mrb[0].mxu0
  %v412 = vpop.f32.mrb[0].mxu0
  %v413 = vpop.f32.mrb[0].mxu0
  %414 = vdwg.mxu0
  %v415 = vmax.f32 %v287, 0.0
  %v416 = vmax.f32 %v289, 0.0
  %v417 = vmax.f32 %v328, 0.0
  %v418 = vmax.f32 %v330, 0.0
  %v419 = vmax.f32 %v369, 0.0
  %v420 = vmax.f32 %v371, 0.0
  %v421 = vmax.f32 %v410, 0.0
  %v422 = vlaneseq
  %v423 = vand.u32 %v422, 127
  %v424 = vadd.s32 %v423, 128
  %v425 = vadd.s32 %v423, 256
  %v426 = vadd.s32 %v423, 384
  %v427 = vadd.s32 %v423, 512
  %v428 = vadd.s32 %v423, 640
  %v429 = vadd.s32 %v423, 768
  %vm430 = vcmp.lt.s32.totalorder %v423, 882
  %vm431 = vcmp.lt.s32.totalorder %v424, 882
  %vm432 = vcmp.lt.s32.totalorder %v425, 882
  %vm433 = vcmp.lt.s32.totalorder %v426, 882
  %vm434 = vcmp.lt.s32.totalorder %v427, 882
  %vm435 = vcmp.lt.s32.totalorder %v428, 882
  %vm436 = vcmp.lt.s32.totalorder %v429, 882
  %v437 = vsel %vm430, %v415, 0.0
  %v438 = vsel %vm431, %v416, 0.0
  %v439 = vsel %vm432, %v417, 0.0
  %v440 = vsel %vm433, %v418, 0.0
  %v441 = vsel %vm434, %v419, 0.0
  %v442 = vsel %vm435, %v420, 0.0
  %v443 = vsel %vm436, %v421, 0.0
  %v444 = vadd.f32 %v437, %v438
  %v445 = vadd.f32 %v444, %v439
  %v446 = vadd.f32 %v445, %v440
  %v447 = vadd.f32 %v446, %v441
  %v448 = vadd.f32 %v447, %v442
  %v449 = vadd.f32 %v448, %v443
  %450 = vadd.xlane.f32.xlu0 %v449
  %v451 = vpop.xlane.xlu0 %450
  %v452 = vrcp.pop 882.0
  %v453 = vmul.f32 %v451, %v452
  %v454 = vsub.f32 %v415, %v453
  %v455 = vsub.f32 %v416, %v453
  %v456 = vsub.f32 %v417, %v453
  %v457 = vsub.f32 %v418, %v453
  %v458 = vsub.f32 %v419, %v453
  %v459 = vsub.f32 %v420, %v453
  %v460 = vsub.f32 %v421, %v453
  %v461 = vsel %vm430, %v454, 0.0
  %v462 = vsel %vm431, %v455, 0.0
  %v463 = vsel %vm432, %v456, 0.0
  %v464 = vsel %vm433, %v457, 0.0
  %v465 = vsel %vm434, %v458, 0.0
  %v466 = vsel %vm435, %v459, 0.0
  %v467 = vsel %vm436, %v460, 0.0
  %v468 = vmul.f32 %v461, %v461
  %v469 = vmul.f32 %v462, %v462
  %v470 = vmul.f32 %v463, %v463
  %v471 = vmul.f32 %v464, %v464
  %v472 = vmul.f32 %v465, %v465
  %v473 = vmul.f32 %v466, %v466
  %v474 = vmul.f32 %v467, %v467
  %v475 = vadd.f32 %v468, %v469
  %v476 = vadd.f32 %v475, %v470
  %v477 = vadd.f32 %v476, %v471
  %v478 = vadd.f32 %v477, %v472
  %v479 = vadd.f32 %v478, %v473
  %v480 = vadd.f32 %v479, %v474
  %481 = vadd.xlane.f32.xlu0 %v480
  %v482 = vpop.xlane.xlu0 %481
  %v483 = vmul.f32 %v482, %v452
  %v484 = vld [vmem:[%s3] sm:$0xff]
  %v485 = vadd.f32 %v483, 1e-05
  %v486 = vrsqrt.pop %v485
  %v487 = vmul.f32 %v484, %v486
  %v488 = vld [vmem:[%s4] sm:$0xff]
  %v489 = vmul.f32 %v453, %v487
  %v490 = vsub.f32 %v488, %v489
  %492 = vset.pattern.permute.xlu0 0
  %493 = vperm.xlu0 %492, %v487
  %v494 = vpop.permute.xlu0 %493
  %v496 = vmul.f32 %v415, %v494
  %v497 = vmul.f32 %v416, %v494
  %v498 = vmul.f32 %v417, %v494
  %v499 = vmul.f32 %v418, %v494
  %v500 = vmul.f32 %v419, %v494
  %v501 = vmul.f32 %v420, %v494
  %v502 = vmul.f32 %v421, %v494
  %504 = vset.pattern.permute.xlu0 0
  %505 = vperm.xlu0 %504, %v490
  %v506 = vpop.permute.xlu0 %505
  %v508 = vadd.f32 %v496, %v506
  %v509 = vadd.f32 %v497, %v506
  %v510 = vadd.f32 %v498, %v506
  %v511 = vadd.f32 %v499, %v506
  %v512 = vadd.f32 %v500, %v506
  %v513 = vadd.f32 %v501, %v506
  %v514 = vadd.f32 %v502, %v506
  %515 = vst [vmem:[%s5] sm:$0xff] %v508
  %516 = vst [vmem:[%s5 + $0x8] sm:$0xff] %v509
  %517 = vst [vmem:[%s5 + $0x10] sm:$0xff] %v510
  %518 = vst [vmem:[%s5 + $0x18] sm:$0xff] %v511
  %519 = vst [vmem:[%s5 + $0x20] sm:$0xff] %v512
  %520 = vst [vmem:[%s5 + $0x28] sm:$0xff] %v513
  %521 = vst [vmem:[%s5 + $0x30] sm:$0xff] %v514
  // Predicated region
  $region22: #{_forward_impl.5} parent=0 // pred_check
    _
  $region23: #{_forward_impl.5} parent=0 // pred_check_branch
    %523 = sbr.rel (0) target = $region25
  $region24: #{_forward_impl.5} parent=0 // pred_region
    _
  $region25: #{_forward_impl.5} parent=0 // pred_fallthru
    _
  // Predicated region
  $region26: #{_forward_impl.5} parent=0 // pred_check
    _
  $region27: #{_forward_impl.5} parent=0 // pred_check_branch
    %525 = sbr.rel (0) target = $region29
  $region28: #{_forward_impl.5} parent=0 // pred_region
    _
  $region29: #{_forward_impl.5} parent=0 // pred_fallthru
    _

// kernel: _forward_impl.6
$region0: #{_forward_impl.6}
  #allocation0 [shape = 'u32[]', space=smem, size = 0x4, offset = 0x4, fixed_abs, tag = 'smem constant byte address 0x4 - core index']
  #allocation1 [shape = 'u32[144,128]{1,0:T(1,128)}', space=vmem, size = 0x12000, scoped, tag = 'internal scratch']
  %s0 = inlined_call_operand.vmem [shape: bf16[8,80], index: 0, kind: input, shape index: {}]
  %s1 = inlined_call_operand.vmem [shape: bf16[80,128], index: 1, kind: input, shape index: {}]
  %s2 = inlined_call_operand.vmem [shape: f32[8,1], index: 2, kind: input, shape index: {}]
  %s3 = inlined_call_operand.vmem [shape: f32[8,1], index: 3, kind: input, shape index: {}]
  %s4 = inlined_call_operand.vmem [shape: f32[8,1], index: 4, kind: input, shape index: {}]
  %s5 = inlined_call_operand.vmem [shape: f32[8,128], index: 5, kind: output, shape index: {}]
  %s6 = sld [smem:[#allocation0]]
  $region30: #{_forward_impl.6} parent=0
    _
  %s8 = ssub.s32 1, %s6
  %s9 = scalar_select 0, %s8, %s6
  // Predicated region
  $region2: #{_forward_impl.6} parent=0 // pred_check
    _
  $region3: #{_forward_impl.6} parent=0 // pred_check_branch
    %11 = sbr.rel (0) target = $region5
  $region4: #{_forward_impl.6} parent=0 // pred_region
    _
  $region5: #{_forward_impl.6} parent=0 // pred_fallthru
    _
  // Predicated region
  $region6: #{_forward_impl.6} parent=0 // pred_check
    _
  $region7: #{_forward_impl.6} parent=0 // pred_check_branch
    %13 = sbr.rel (0) target = $region9
  $region8: #{_forward_impl.6} parent=0 // pred_region
    _
  $region9: #{_forward_impl.6} parent=0 // pred_fallthru
    _
  // Predicated region
  $region10: #{_forward_impl.6} parent=0 // pred_check
    _
  $region11: #{_forward_impl.6} parent=0 // pred_check_branch
    %15 = sbr.rel (0) target = $region13
  $region12: #{_forward_impl.6} parent=0 // pred_region
    _
  $region13: #{_forward_impl.6} parent=0 // pred_fallthru
    _
  // Predicated region
  $region14: #{_forward_impl.6} parent=0 // pred_check
    _
  $region15: #{_forward_impl.6} parent=0 // pred_check_branch
    %17 = sbr.rel (0) target = $region17
  $region16: #{_forward_impl.6} parent=0 // pred_region
    _
  $region17: #{_forward_impl.6} parent=0 // pred_fallthru
    _
  // Predicated region
  $region18: #{_forward_impl.6} parent=0 // pred_check
    _
  $region19: #{_forward_impl.6} parent=0 // pred_check_branch
    %19 = sbr.rel (0) target = $region21
  $region20: #{_forward_impl.6} parent=0 // pred_region
    _
  $region21: #{_forward_impl.6} parent=0 // pred_fallthru
    _
  %v21 = vld [vmem:[%s0] sm:$0xf]
  %v22 = vld [vmem:[%s1] sm:$0xf]
  %v23 = vld [vmem:[%s1 + $0x4] sm:$0xf]
  %v24 = vld [vmem:[%s1 + $0x8] sm:$0xf]
  %v25 = vld [vmem:[%s1 + $0xc] sm:$0xf]
  %v26 = vld [vmem:[%s1 + $0x10] sm:$0xf]
  %v27 = vld [vmem:[%s1 + $0x14] sm:$0xf]
  %v28 = vld [vmem:[%s1 + $0x18] sm:$0xf]
  %v29 = vld [vmem:[%s1 + $0x1c] sm:$0xf]
  %v30 = vld [vmem:[%s1 + $0x20] sm:$0xf]
  %v31 = vld [vmem:[%s1 + $0x24] sm:$0xf]
  %v32 = vld [vmem:[%s2] sm:$0xff]
  %34 = vset.pattern.permute.xlu0 0
  %35 = vperm.xlu0 %34, %v32
  %v36 = vpop.permute.xlu0 %35
  %v48 = vunpack.c.l.b16 %v22
  %v49 = vunpack.c.l.b16 %v23
  %v50 = vunpack.c.l.b16 %v24
  %v51 = vunpack.c.l.b16 %v25
  %v52 = vunpack.c.l.b16 %v26
  %v53 = vunpack.c.l.b16 %v27
  %v54 = vunpack.c.l.b16 %v28
  %v55 = vunpack.c.l.b16 %v29
  %v56 = vunpack.c.l.b16 %v30
  %v57 = vunpack.c.l.b16 %v31
  %v58 = vpack.c.b16 %v49, %v48
  %v59 = vpack.c.b16 %v51, %v50
  %v60 = vpack.c.b16 %v53, %v52
  %v61 = vpack.c.b16 %v55, %v54
  %v62 = vpack.c.b16 %v57, %v56
  %vm68 = vcmask 654336
  %v70 = vsel %vm68, %v21, 0
  %72 = vmatprep.subr.bf16.mxu0 0
  %73 = vmatpush1.bf16.msra.mxu0 %v58
  %74 = vmatprep.subr.bf16.mxu0 0
  %75 = vmatpush1.bf16.msra.mxu0 %v59
  %76 = vmatprep.subr.bf16.mxu0 0
  %77 = vmatpush1.bf16.msra.mxu0 %v60
  %78 = vmatprep.subr.bf16.mxu0 0
  %79 = vmatpush1.bf16.msra.mxu0 %v61
  %80 = vmatprep.subr.bf16.mxu0 0
  %81 = vmatpush1.bf16.msra.mxu0 %v62
  %82 = vmatprep.subr.bf16.mxu0 0
  %83 = vmatpush1.bf16.msra.mxu0 0
  %84 = vmatprep.subr.bf16.mxu0 0
  %85 = vmatpush1.bf16.msra.mxu0 0
  %86 = vmatprep.subr.bf16.mxu0 0
  %87 = vmatpush1.bf16.msra.mxu0 0
  %88 = vmatprep.subr.bf16.mxu0 0
  %89 = vmatpush1.bf16.msra.mxu0 0
  %90 = vmatprep.subr.bf16.mxu0 0
  %91 = vmatpush1.bf16.msra.mxu0 0
  %92 = vmatprep.subr.bf16.mxu0 0
  %93 = vmatpush1.bf16.msra.mxu0 0
  %94 = vmatprep.subr.bf16.mxu0 0
  %95 = vmatpush1.bf16.msra.mxu0 0
  %96 = vmatprep.subr.bf16.mxu0 0
  %97 = vmatpush1.bf16.msra.mxu0 0
  %98 = vmatprep.subr.bf16.mxu0 0
  %99 = vmatpush1.bf16.msra.mxu0 0
  %100 = vmatprep.subr.bf16.mxu0 0
  %101 = vmatpush1.bf16.msra.mxu0 0
  %102 = vmatprep.subr.bf16.mxu0 0
  %103 = vmatpush1.bf16.msra.mxu0 0
  %104 = vmatprep.mubr.bf16.mxu0 0
  %105 = vmatmul.mubr.bf16.gmra.mrb[0].mxu0 %v70
  %v106 = vpop.f32.mrb[0].mxu0
  %v107 = vadd.f32 %v36, %v106
  %v108 = vpop.f32.mrb[0].mxu0
  %v109 = vpop.f32.mrb[0].mxu0
  %v110 = vpop.f32.mrb[0].mxu0
  %111 = vdwg.mxu0
  %v112 = vmax.f32 %v107, 0.0
  %113 = vadd.xlane.f32.xlu0 %v112
  %v114 = vpop.xlane.xlu0 %113
  %v115 = vrcp.pop 128.0
  %v116 = vmul.f32 %v114, %v115
  %v117 = vsub.f32 %v112, %v116
  %v118 = vmul.f32 %v117, %v117
  %119 = vadd.xlane.f32.xlu0 %v118
  %v120 = vpop.xlane.xlu0 %119
  %v121 = vmul.f32 %v120, %v115
  %v122 = vld [vmem:[%s3] sm:$0xff]
  %v123 = vadd.f32 %v121, 1e-05
  %v124 = vrsqrt.pop %v123
  %v125 = vmul.f32 %v122, %v124
  %v126 = vld [vmem:[%s4] sm:$0xff]
  %v127 = vmul.f32 %v116, %v125
  %v128 = vsub.f32 %v126, %v127
  %130 = vset.pattern.permute.xlu0 0
  %131 = vperm.xlu0 %130, %v125
  %v132 = vpop.permute.xlu0 %131
  %v134 = vmul.f32 %v112, %v132
  %136 = vset.pattern.permute.xlu0 0
  %137 = vperm.xlu0 %136, %v128
  %v138 = vpop.permute.xlu0 %137
  %v140 = vadd.f32 %v134, %v138
  %141 = vst [vmem:[%s5] sm:$0xff] %v140
  // Predicated region
  $region22: #{_forward_impl.6} parent=0 // pred_check
    _
  $region23: #{_forward_impl.6} parent=0 // pred_check_branch
    %143 = sbr.rel (0) target = $region25
  $region24: #{_forward_impl.6} parent=0 // pred_region
    _
  $region25: #{_forward_impl.6} parent=0 // pred_fallthru
    _
  // Predicated region
  $region26: #{_forward_impl.6} parent=0 // pred_check
    _
  $region27: #{_forward_impl.6} parent=0 // pred_check_branch
    %145 = sbr.rel (0) target = $region29
  $region28: #{_forward_impl.6} parent=0 // pred_region
    _
  $region29: #{_forward_impl.6} parent=0 // pred_fallthru
    _

// kernel: _forward_impl.7
$region0: #{_forward_impl.7}
  #allocation0 [shape = 'u32[]', space=smem, size = 0x4, offset = 0x4, fixed_abs, tag = 'smem constant byte address 0x4 - core index']
  #allocation1 [shape = 'u32[144,128]{1,0:T(1,128)}', space=vmem, size = 0x12000, scoped, tag = 'internal scratch']
  %s0 = inlined_call_operand.vmem [shape: bf16[8,80], index: 0, kind: input, shape index: {}]
  %s1 = inlined_call_operand.vmem [shape: bf16[80,128], index: 1, kind: input, shape index: {}]
  %s2 = inlined_call_operand.vmem [shape: f32[8,1], index: 2, kind: input, shape index: {}]
  %s3 = inlined_call_operand.vmem [shape: f32[8,1], index: 3, kind: input, shape index: {}]
  %s4 = inlined_call_operand.vmem [shape: f32[8,1], index: 4, kind: input, shape index: {}]
  %s5 = inlined_call_operand.vmem [shape: f32[8,128], index: 5, kind: output, shape index: {}]
  %s6 = sld [smem:[#allocation0]]
  $region30: #{_forward_impl.7} parent=0
    _
  %s8 = ssub.s32 1, %s6
  %s9 = scalar_select 0, %s8, %s6
  // Predicated region
  $region2: #{_forward_impl.7} parent=0 // pred_check
    _
  $region3: #{_forward_impl.7} parent=0 // pred_check_branch
    %11 = sbr.rel (0) target = $region5
  $region4: #{_forward_impl.7} parent=0 // pred_region
    _
  $region5: #{_forward_impl.7} parent=0 // pred_fallthru
    _
  // Predicated region
  $region6: #{_forward_impl.7} parent=0 // pred_check
    _
  $region7: #{_forward_impl.7} parent=0 // pred_check_branch
    %13 = sbr.rel (0) target = $region9
  $region8: #{_forward_impl.7} parent=0 // pred_region
    _
  $region9: #{_forward_impl.7} parent=0 // pred_fallthru
    _
  // Predicated region
  $region10: #{_forward_impl.7} parent=0 // pred_check
    _
  $region11: #{_forward_impl.7} parent=0 // pred_check_branch
    %15 = sbr.rel (0) target = $region13
  $region12: #{_forward_impl.7} parent=0 // pred_region
    _
  $region13: #{_forward_impl.7} parent=0 // pred_fallthru
    _
  // Predicated region
  $region14: #{_forward_impl.7} parent=0 // pred_check
    _
  $region15: #{_forward_impl.7} parent=0 // pred_check_branch
    %17 = sbr.rel (0) target = $region17
  $region16: #{_forward_impl.7} parent=0 // pred_region
    _
  $region17: #{_forward_impl.7} parent=0 // pred_fallthru
    _
  // Predicated region
  $region18: #{_forward_impl.7} parent=0 // pred_check
    _
  $region19: #{_forward_impl.7} parent=0 // pred_check_branch
    %19 = sbr.rel (0) target = $region21
  $region20: #{_forward_impl.7} parent=0 // pred_region
    _
  $region21: #{_forward_impl.7} parent=0 // pred_fallthru
    _
  %v21 = vld [vmem:[%s0] sm:$0xf]
  %v22 = vld [vmem:[%s1] sm:$0xf]
  %v23 = vld [vmem:[%s1 + $0x4] sm:$0xf]
  %v24 = vld [vmem:[%s1 + $0x8] sm:$0xf]
  %v25 = vld [vmem:[%s1 + $0xc] sm:$0xf]
  %v26 = vld [vmem:[%s1 + $0x10] sm:$0xf]
  %v27 = vld [vmem:[%s1 + $0x14] sm:$0xf]
  %v28 = vld [vmem:[%s1 + $0x18] sm:$0xf]
  %v29 = vld [vmem:[%s1 + $0x1c] sm:$0xf]
  %v30 = vld [vmem:[%s1 + $0x20] sm:$0xf]
  %v31 = vld [vmem:[%s1 + $0x24] sm:$0xf]
  %v32 = vld [vmem:[%s2] sm:$0xff]
  %34 = vset.pattern.permute.xlu0 0
  %35 = vperm.xlu0 %34, %v32
  %v36 = vpop.permute.xlu0 %35
  %v48 = vunpack.c.l.b16 %v22
  %v49 = vunpack.c.l.b16 %v23
  %v50 = vunpack.c.l.b16 %v24
  %v51 = vunpack.c.l.b16 %v25
  %v52 = vunpack.c.l.b16 %v26
  %v53 = vunpack.c.l.b16 %v27
  %v54 = vunpack.c.l.b16 %v28
  %v55 = vunpack.c.l.b16 %v29
  %v56 = vunpack.c.l.b16 %v30
  %v57 = vunpack.c.l.b16 %v31
  %v58 = vpack.c.b16 %v49, %v48
  %v59 = vpack.c.b16 %v51, %v50
  %v60 = vpack.c.b16 %v53, %v52
  %v61 = vpack.c.b16 %v55, %v54
  %v62 = vpack.c.b16 %v57, %v56
  %vm68 = vcmask 654336
  %v70 = vsel %vm68, %v21, 0
  %72 = vmatprep.subr.bf16.mxu0 0
  %73 = vmatpush1.bf16.msra.mxu0 %v58
  %74 = vmatprep.subr.bf16.mxu0 0
  %75 = vmatpush1.bf16.msra.mxu0 %v59
  %76 = vmatprep.subr.bf16.mxu0 0
  %77 = vmatpush1.bf16.msra.mxu0 %v60
  %78 = vmatprep.subr.bf16.mxu0 0
  %79 = vmatpush1.bf16.msra.mxu0 %v61
  %80 = vmatprep.subr.bf16.mxu0 0
  %81 = vmatpush1.bf16.msra.mxu0 %v62
  %82 = vmatprep.subr.bf16.mxu0 0
  %83 = vmatpush1.bf16.msra.mxu0 0
  %84 = vmatprep.subr.bf16.mxu0 0
  %85 = vmatpush1.bf16.msra.mxu0 0
  %86 = vmatprep.subr.bf16.mxu0 0
  %87 = vmatpush1.bf16.msra.mxu0 0
  %88 = vmatprep.subr.bf16.mxu0 0
  %89 = vmatpush1.bf16.msra.mxu0 0
  %90 = vmatprep.subr.bf16.mxu0 0
  %91 = vmatpush1.bf16.msra.mxu0 0
  %92 = vmatprep.subr.bf16.mxu0 0
  %93 = vmatpush1.bf16.msra.mxu0 0
  %94 = vmatprep.subr.bf16.mxu0 0
  %95 = vmatpush1.bf16.msra.mxu0 0
  %96 = vmatprep.subr.bf16.mxu0 0
  %97 = vmatpush1.bf16.msra.mxu0 0
  %98 = vmatprep.subr.bf16.mxu0 0
  %99 = vmatpush1.bf16.msra.mxu0 0
  %100 = vmatprep.subr.bf16.mxu0 0
  %101 = vmatpush1.bf16.msra.mxu0 0
  %102 = vmatprep.subr.bf16.mxu0 0
  %103 = vmatpush1.bf16.msra.mxu0 0
  %104 = vmatprep.mubr.bf16.mxu0 0
  %105 = vmatmul.mubr.bf16.gmra.mrb[0].mxu0 %v70
  %v106 = vpop.f32.mrb[0].mxu0
  %v107 = vadd.f32 %v36, %v106
  %v108 = vpop.f32.mrb[0].mxu0
  %v109 = vpop.f32.mrb[0].mxu0
  %v110 = vpop.f32.mrb[0].mxu0
  %111 = vdwg.mxu0
  %v112 = vmax.f32 %v107, 0.0
  %v113 = vlaneseq
  %v114 = vand.u32 %v113, 127
  %vm115 = vcmp.lt.s32.totalorder %v114, 8
  %v116 = vsel %vm115, %v112, 0.0
  %117 = vadd.xlane.f32.xlu0 %v116
  %v118 = vpop.xlane.xlu0 %117
  %v119 = vrcp.pop 8.0
  %v120 = vmul.f32 %v118, %v119
  %v121 = vsub.f32 %v112, %v120
  %v122 = vsel %vm115, %v121, 0.0
  %v123 = vmul.f32 %v122, %v122
  %124 = vadd.xlane.f32.xlu0 %v123
  %v125 = vpop.xlane.xlu0 %124
  %v126 = vmul.f32 %v125, %v119
  %v127 = vld [vmem:[%s3] sm:$0xff]
  %v128 = vadd.f32 %v126, 1e-05
  %v129 = vrsqrt.pop %v128
  %v130 = vmul.f32 %v127, %v129
  %v131 = vld [vmem:[%s4] sm:$0xff]
  %v132 = vmul.f32 %v120, %v130
  %v133 = vsub.f32 %v131, %v132
  %135 = vset.pattern.permute.xlu0 0
  %136 = vperm.xlu0 %135, %v130
  %v137 = vpop.permute.xlu0 %136
  %v139 = vmul.f32 %v112, %v137
  %141 = vset.pattern.permute.xlu0 0
  %142 = vperm.xlu0 %141, %v133
  %v143 = vpop.permute.xlu0 %142
  %v145 = vadd.f32 %v139, %v143
  %146 = vst [vmem:[%s5] sm:$0xff] %v145
  // Predicated region
  $region22: #{_forward_impl.7} parent=0 // pred_check
    _
  $region23: #{_forward_impl.7} parent=0 // pred_check_branch
    %148 = sbr.rel (0) target = $region25
  $region24: #{_forward_impl.7} parent=0 // pred_region
    _
  $region25: #{_forward_impl.7} parent=0 // pred_fallthru
    _
  // Predicated region
  $region26: #{_forward_impl.7} parent=0 // pred_check
    _
  $region27: #{_forward_impl.7} parent=0 // pred_check_branch
    %150 = sbr.rel (0) target = $region29
  $region28: #{_forward_impl.7} parent=0 // pred_region
    _
  $region29: #{_forward_impl.7} parent=0 // pred_fallthru
    _

</llo_original>
